<compile_context>
chip_gen: v7x
topology: tpu7x:2x2x1
jax: 0.10.0
libtpu: 0.0.40
codegen_flags: <defaults>
</compile_context>

<pallas_src>
import functools

import jax
import jax.numpy as jnp
import numpy as np
from jax.experimental import pallas as pl
from jax.experimental.pallas import tpu as pltpu


# ---------------------------------------------------------------------------
# Pallas kernel: whole forward pass in VMEM.
# ---------------------------------------------------------------------------
def lstm_chord_kernel(x_ref,      # [T*Bp, D_in]  f32  (time-major, batch-padded)
                      len_ref,    # [Bp, 1]       i32  (0 on padded batch rows)
                      we_ref,     # [D_in, E]     f32  (embed.weight.T)
                      be_ref,     # [1, E]        f32
                      wih_ref,    # [E, 4H]       f32  (lstm.weight_ih_l0.T)
                      whh_ref,    # [H, 4H]       f32  (lstm.weight_hh_l0.T)
                      b_ref,      # [1, 4H]       f32  (bias_ih + bias_hh)
                      wo_ref,     # [H, Cp]       f32  (output.weight.T, lane-padded)
                      bo_ref,     # [1, Cp]       f32  (lane-padded)
                      out_ref,    # [T*Bp, Cp]    f32
                      *, T, Bp):
    H = whh_ref.shape[0]

    # ---- input path for ALL timesteps: two big matmuls (M = T*Bp) ----------
    x = x_ref[...]                                                  # [T*Bp, D]
    e = jnp.maximum(
        jnp.dot(x, we_ref[...], preferred_element_type=jnp.float32)
        + be_ref[...], 0.0)                                         # [T*Bp, E]
    pre = (jnp.dot(e, wih_ref[...], preferred_element_type=jnp.float32)
           + b_ref[...])                                            # [T*Bp, 4H]

    # ---- operands that must stay live across the recurrence ----------------
    # (read here, not at the top: x/e/we/wih are dead by the time these start)
    whh = whh_ref[...]                                              # [H, 4H]
    wo = wo_ref[...]                                                # [H, Cp]
    bo = bo_ref[...]                                                # [1, Cp]
    len_col = len_ref[...]                                          # [Bp, 1] i32

    # ---- serial LSTM recurrence (fully unrolled; T static & small) ---------
    # PyTorch gate order in the 4H axis: i, f, g, o.
    h = jnp.zeros((Bp, H), jnp.float32)
    c = jnp.zeros((Bp, H), jnp.float32)
    for t in range(T):
        gates = pre[t * Bp:(t + 1) * Bp, :] + jnp.dot(
            h, whh, preferred_element_type=jnp.float32)             # [Bp, 4H]
        s = jax.nn.sigmoid(gates)       # one full-tile EUP pass (i, f, o slices)
        g = jnp.tanh(gates)             # one full-tile EUP pass (g slice)
        c = s[:, H:2 * H] * c + s[:, 0:H] * g[:, 2 * H:3 * H]
        h = s[:, 3 * H:4 * H] * jnp.tanh(c)                         # [Bp, H]

        # pack/pad_packed masking + ReLU + output projection fused per step.
        # This matmul/store is off the h->h critical path (free filler under
        # the next step's MXU/EUP latency); the store is 128-lane dense.
        mask_t = (len_col > t).astype(jnp.float32)                  # [Bp, 1]
        r = mask_t * jnp.maximum(h, 0.0)                            # [Bp, H]
        out_ref[t * Bp:(t + 1) * Bp, :] = (
            jnp.dot(r, wo, preferred_element_type=jnp.float32) + bo)  # [Bp, Cp]


# ---------------------------------------------------------------------------
# Wrapper
# ---------------------------------------------------------------------------
def lstm_chord_forward(inputs, lengths, params):
    """inputs: [B, T, D_in] f32 (batch_first), lengths: [B] int. Returns [B, T, C]."""
    B, T, D = inputs.shape
    H = params["whh"].shape[0]
    C = params["wo"].shape[1]

    Bp = 8 * pl.cdiv(B, 8)        # pad batch to sublane multiple (8)
    Cp = 128 * pl.cdiv(C, 128)    # pad output classes to lane multiple (128)

    # time-major, batch-padded, flattened to a 2-D slab
    x_tm = jnp.transpose(inputs.astype(jnp.float32), (1, 0, 2))     # [T, B, D]
    x_tm = jnp.pad(x_tm, ((0, 0), (0, Bp - B), (0, 0)))             # [T, Bp, D]
    x2d = x_tm.reshape(T * Bp, D)

    # lengths column for in-kernel masking (padded batch rows -> length 0)
    len_col = jnp.pad(lengths.astype(jnp.int32), (0, Bp - B)).reshape(Bp, 1)

    # lane-pad the output projection so every per-step store is lane-dense
    wo_p = jnp.zeros((H, Cp), jnp.float32).at[:, :C].set(params["wo"])
    bo_p = jnp.zeros((1, Cp), jnp.float32).at[:, :C].set(params["bo"])

    vmem = pl.BlockSpec(memory_space=pltpu.MemorySpace.VMEM)
    out2d = pl.pallas_call(
        functools.partial(lstm_chord_kernel, T=T, Bp=Bp),
        out_shape=jax.ShapeDtypeStruct((T * Bp, Cp), jnp.float32),
        in_specs=[vmem] * 9,
        out_specs=vmem,
    )(x2d, len_col,
      params["we"], params["be"],
      params["wih"], params["whh"], params["b"],
      wo_p, bo_p)

    out = out2d.reshape(T, Bp, Cp)[:, :B, :C]                       # [T, B, C]
    return jnp.transpose(out, (1, 0, 2))                            # [B, T, C]


# ---------------------------------------------------------------------------
# Pure-JAX reference (mirrors PyTorch semantics) for verification
# ---------------------------------------------------------------------------
def reference_forward(inputs, lengths, params):
    B, T, _ = inputs.shape
    H = params["whh"].shape[0]
    e = jnp.maximum(inputs @ params["we"] + params["be"], 0.0)      # [B, T, E]
    h = jnp.zeros((B, H), jnp.float32)
    c = jnp.zeros((B, H), jnp.float32)
    outs = []
    for t in range(T):
        gates = e[:, t, :] @ params["wih"] + h @ params["whh"] + params["b"]
        i_g = jax.nn.sigmoid(gates[:, 0:H])
        f_g = jax.nn.sigmoid(gates[:, H:2 * H])
        g_g = jnp.tanh(gates[:, 2 * H:3 * H])
        o_g = jax.nn.sigmoid(gates[:, 3 * H:4 * H])
        c = f_g * c + i_g * g_g
        h = o_g * jnp.tanh(c)
        valid = (lengths > t).reshape(B, 1)
        lstm_out = jnp.where(valid, h, 0.0)
        outs.append(jnp.maximum(lstm_out, 0.0) @ params["wo"] + params["bo"])
    return jnp.stack(outs, axis=1)                                  # [B, T, C]


# ---------------------------------------------------------------------------
# Deterministic parameter init (PyTorch-like uniform(-1/sqrt(fan), 1/sqrt(fan)))
# ---------------------------------------------------------------------------
def init_params(key, input_size, embed_size, hidden_size, target_size):
    ks = jax.random.split(key, 9)

    def unif(k, shape, fan):
        bound = 1.0 / np.sqrt(fan)
        return jax.random.uniform(k, shape, jnp.float32, -bound, bound)

    E, H, C, D = embed_size, hidden_size, target_size, input_size
    params = {
        "we":  unif(ks[0], (D, E), D),                 # embed.weight.T
        "be":  unif(ks[1], (1, E), D),
        "wih": unif(ks[2], (E, 4 * H), H),             # lstm.weight_ih_l0.T
        "whh": unif(ks[3], (H, 4 * H), H),             # lstm.weight_hh_l0.T
        "b":   unif(ks[4], (1, 4 * H), H) + unif(ks[5], (1, 4 * H), H),
        "wo":  unif(ks[6], (H, C), H),                 # output.weight.T
        "bo":  unif(ks[7], (1, C), H),
    }
    return params


if __name__ == "__main__":
    # small shapes consistent with the module (multi-hot chord vectors)
    B, T = 4, 8
    input_size, embed_size, hidden_size, target_size = 24, 32, 32, 16

    key = jax.random.PRNGKey(0)
    k_x, k_p = jax.random.split(key)

    # multi-hot style inputs (0/1 floats), padded to T
    inputs = (jax.random.uniform(k_x, (B, T, input_size)) > 0.7).astype(jnp.float32)
    lengths = jnp.array([8, 5, 3, 8], dtype=jnp.int32)   # max(lengths) == T

    params = init_params(k_p, input_size, embed_size, hidden_size, target_size)

    out = lstm_chord_forward(inputs, lengths, params)
    out = jax.block_until_ready(out)

    # PyTorch pad_packed_sequence truncates to max(lengths)
    t_max = int(jnp.max(lengths))
    out = out[:, :t_max, :]

    ref = reference_forward(inputs, lengths, params)[:, :t_max, :]
    np.testing.assert_allclose(np.asarray(out), np.asarray(ref),
                               rtol=1e-3, atol=1e-3)

    print("KERNEL_OK")
</pallas_src>

<mosaic_0001>
module attributes {stable_mosaic.version = 11 : i64} {
  func.func @lstm_chord_kernel(%arg0: memref<64x24xf32, #tpu.memory_space<vmem>>, %arg1: memref<8x1xi32, #tpu.memory_space<vmem>>, %arg2: memref<24x32xf32, #tpu.memory_space<vmem>>, %arg3: memref<1x32xf32, #tpu.memory_space<vmem>>, %arg4: memref<32x128xf32, #tpu.memory_space<vmem>>, %arg5: memref<32x128xf32, #tpu.memory_space<vmem>>, %arg6: memref<1x128xf32, #tpu.memory_space<vmem>>, %arg7: memref<32x128xf32, #tpu.memory_space<vmem>>, %arg8: memref<1x128xf32, #tpu.memory_space<vmem>>, %arg9: memref<64x128xf32, #tpu.memory_space<vmem>>) attributes {dimension_semantics = [], scalar_prefetch = 0 : i64, scratch_operands = 0 : i64, tpu.core_type = #tpu.core_type<tc>} {
    %c0 = arith.constant 0 : index
    %c0_0 = arith.constant 0 : index
    %0 = vector.load %arg0[%c0, %c0_0] : memref<64x24xf32, #tpu.memory_space<vmem>>, vector<64x24xf32>
    %c0_1 = arith.constant 0 : index
    %c0_2 = arith.constant 0 : index
    %1 = vector.load %arg2[%c0_1, %c0_2] : memref<24x32xf32, #tpu.memory_space<vmem>>, vector<24x32xf32>
    %cst = arith.constant dense<0.000000e+00> : vector<64x32xf32>
    %2 = tpu.matmul %0, %1, %cst {dimension_numbers = #tpu.dot_dimension_numbers<[1], [0], [0], [1], [0, 0, 1, 1], [], []>} : vector<64x24xf32>, vector<24x32xf32>, vector<64x32xf32> -> vector<64x32xf32>
    %c0_3 = arith.constant 0 : index
    %c0_4 = arith.constant 0 : index
    %3 = vector.load %arg3[%c0_3, %c0_4] : memref<1x32xf32, #tpu.memory_space<vmem>>, vector<1x32xf32>
    %4 = vector.broadcast %3 : vector<1x32xf32> to vector<64x32xf32>
    %5 = arith.addf %2, %4 : vector<64x32xf32>
    %cst_5 = arith.constant 0.000000e+00 : f32
    %6 = vector.broadcast %cst_5 : f32 to vector<64x32xf32>
    %7 = arith.maximumf %5, %6 : vector<64x32xf32>
    %c0_6 = arith.constant 0 : index
    %c0_7 = arith.constant 0 : index
    %8 = vector.load %arg4[%c0_6, %c0_7] : memref<32x128xf32, #tpu.memory_space<vmem>>, vector<32x128xf32>
    %cst_8 = arith.constant dense<0.000000e+00> : vector<64x128xf32>
    %9 = tpu.matmul %7, %8, %cst_8 {dimension_numbers = #tpu.dot_dimension_numbers<[1], [0], [0], [1], [0, 0, 1, 1], [], []>} : vector<64x32xf32>, vector<32x128xf32>, vector<64x128xf32> -> vector<64x128xf32>
    %c0_9 = arith.constant 0 : index
    %c0_10 = arith.constant 0 : index
    %10 = vector.load %arg6[%c0_9, %c0_10] : memref<1x128xf32, #tpu.memory_space<vmem>>, vector<1x128xf32>
    %11 = vector.broadcast %10 : vector<1x128xf32> to vector<64x128xf32>
    %12 = arith.addf %9, %11 : vector<64x128xf32>
    %c0_11 = arith.constant 0 : index
    %c0_12 = arith.constant 0 : index
    %13 = vector.load %arg5[%c0_11, %c0_12] : memref<32x128xf32, #tpu.memory_space<vmem>>, vector<32x128xf32>
    %c0_13 = arith.constant 0 : index
    %c0_14 = arith.constant 0 : index
    %14 = vector.load %arg7[%c0_13, %c0_14] : memref<32x128xf32, #tpu.memory_space<vmem>>, vector<32x128xf32>
    %c0_15 = arith.constant 0 : index
    %c0_16 = arith.constant 0 : index
    %15 = vector.load %arg8[%c0_15, %c0_16] : memref<1x128xf32, #tpu.memory_space<vmem>>, vector<1x128xf32>
    %c0_17 = arith.constant 0 : index
    %c0_18 = arith.constant 0 : index
    %16 = vector.load %arg1[%c0_17, %c0_18] : memref<8x1xi32, #tpu.memory_space<vmem>>, vector<8x1xi32>
    %cst_19 = arith.constant 0.000000e+00 : f32
    %17 = vector.broadcast %cst_19 : f32 to vector<8x32xf32>
    %cst_20 = arith.constant 0.000000e+00 : f32
    %18 = vector.broadcast %cst_20 : f32 to vector<8x32xf32>
    %19 = vector.extract_strided_slice %12 {offsets = [0, 0], sizes = [8, 128], strides = [1, 1]} : vector<64x128xf32> to vector<8x128xf32>
    %cst_21 = arith.constant dense<0.000000e+00> : vector<8x128xf32>
    %20 = tpu.matmul %17, %13, %cst_21 {dimension_numbers = #tpu.dot_dimension_numbers<[1], [0], [0], [1], [0, 0, 1, 1], [], []>} : vector<8x32xf32>, vector<32x128xf32>, vector<8x128xf32> -> vector<8x128xf32>
    %21 = arith.addf %19, %20 : vector<8x128xf32>
    %22 = arith.negf %21 : vector<8x128xf32>
    %23 = math.exp %22 : vector<8x128xf32>
    %cst_22 = arith.constant 1.000000e+00 : f32
    %24 = vector.broadcast %cst_22 : f32 to vector<8x128xf32>
    %25 = arith.addf %24, %23 : vector<8x128xf32>
    %26 = arith.divf %24, %25 : vector<8x128xf32>
    %27 = math.tanh %21 : vector<8x128xf32>
    %28 = vector.extract_strided_slice %26 {offsets = [0, 32], sizes = [8, 32], strides = [1, 1]} : vector<8x128xf32> to vector<8x32xf32>
    %29 = arith.mulf %28, %18 : vector<8x32xf32>
    %30 = vector.extract_strided_slice %26 {offsets = [0, 0], sizes = [8, 32], strides = [1, 1]} : vector<8x128xf32> to vector<8x32xf32>
    %31 = vector.extract_strided_slice %27 {offsets = [0, 64], sizes = [8, 32], strides = [1, 1]} : vector<8x128xf32> to vector<8x32xf32>
    %32 = arith.mulf %30, %31 : vector<8x32xf32>
    %33 = arith.addf %29, %32 : vector<8x32xf32>
    %34 = vector.extract_strided_slice %26 {offsets = [0, 96], sizes = [8, 32], strides = [1, 1]} : vector<8x128xf32> to vector<8x32xf32>
    %35 = math.tanh %33 : vector<8x32xf32>
    %36 = arith.mulf %34, %35 : vector<8x32xf32>
    %c0_i32 = arith.constant 0 : i32
    %37 = vector.broadcast %c0_i32 : i32 to vector<8x1xi32>
    %38 = arith.cmpi sgt, %16, %37 : vector<8x1xi32>
    %39 = arith.extui %38 : vector<8x1xi1> to vector<8x1xi32>
    %40 = arith.sitofp %39 : vector<8x1xi32> to vector<8x1xf32>
    %cst_23 = arith.constant 0.000000e+00 : f32
    %41 = vector.broadcast %cst_23 : f32 to vector<8x32xf32>
    %42 = arith.maximumf %36, %41 : vector<8x32xf32>
    %43 = vector.broadcast %40 : vector<8x1xf32> to vector<8x32xf32>
    %44 = arith.mulf %43, %42 : vector<8x32xf32>
    %cst_24 = arith.constant dense<0.000000e+00> : vector<8x128xf32>
    %45 = tpu.matmul %44, %14, %cst_24 {dimension_numbers = #tpu.dot_dimension_numbers<[1], [0], [0], [1], [0, 0, 1, 1], [], []>} : vector<8x32xf32>, vector<32x128xf32>, vector<8x128xf32> -> vector<8x128xf32>
    %46 = vector.broadcast %15 : vector<1x128xf32> to vector<8x128xf32>
    %47 = arith.addf %45, %46 : vector<8x128xf32>
    %c0_25 = arith.constant 0 : index
    %c0_26 = arith.constant 0 : index
    %48 = vector.load %arg9[%c0_25, %c0_26] : memref<64x128xf32, #tpu.memory_space<vmem>>, vector<8x128xf32>
    tpu.vector_store %arg9[%c0_25, %c0_26], %47 {strides = array<i32>} : memref<64x128xf32, #tpu.memory_space<vmem>>, vector<8x128xf32>,
    %49 = vector.extract_strided_slice %12 {offsets = [8, 0], sizes = [8, 128], strides = [1, 1]} : vector<64x128xf32> to vector<8x128xf32>
    %cst_27 = arith.constant dense<0.000000e+00> : vector<8x128xf32>
    %50 = tpu.matmul %36, %13, %cst_27 {dimension_numbers = #tpu.dot_dimension_numbers<[1], [0], [0], [1], [0, 0, 1, 1], [], []>} : vector<8x32xf32>, vector<32x128xf32>, vector<8x128xf32> -> vector<8x128xf32>
    %51 = arith.addf %49, %50 : vector<8x128xf32>
    %52 = arith.negf %51 : vector<8x128xf32>
    %53 = math.exp %52 : vector<8x128xf32>
    %cst_28 = arith.constant 1.000000e+00 : f32
    %54 = vector.broadcast %cst_28 : f32 to vector<8x128xf32>
    %55 = arith.addf %54, %53 : vector<8x128xf32>
    %56 = arith.divf %54, %55 : vector<8x128xf32>
    %57 = math.tanh %51 : vector<8x128xf32>
    %58 = vector.extract_strided_slice %56 {offsets = [0, 32], sizes = [8, 32], strides = [1, 1]} : vector<8x128xf32> to vector<8x32xf32>
    %59 = arith.mulf %58, %33 : vector<8x32xf32>
    %60 = vector.extract_strided_slice %56 {offsets = [0, 0], sizes = [8, 32], strides = [1, 1]} : vector<8x128xf32> to vector<8x32xf32>
    %61 = vector.extract_strided_slice %57 {offsets = [0, 64], sizes = [8, 32], strides = [1, 1]} : vector<8x128xf32> to vector<8x32xf32>
    %62 = arith.mulf %60, %61 : vector<8x32xf32>
    %63 = arith.addf %59, %62 : vector<8x32xf32>
    %64 = vector.extract_strided_slice %56 {offsets = [0, 96], sizes = [8, 32], strides = [1, 1]} : vector<8x128xf32> to vector<8x32xf32>
    %65 = math.tanh %63 : vector<8x32xf32>
    %66 = arith.mulf %64, %65 : vector<8x32xf32>
    %c1_i32 = arith.constant 1 : i32
    %67 = vector.broadcast %c1_i32 : i32 to vector<8x1xi32>
    %68 = arith.cmpi sgt, %16, %67 : vector<8x1xi32>
    %69 = arith.extui %68 : vector<8x1xi1> to vector<8x1xi32>
    %70 = arith.sitofp %69 : vector<8x1xi32> to vector<8x1xf32>
    %cst_29 = arith.constant 0.000000e+00 : f32
    %71 = vector.broadcast %cst_29 : f32 to vector<8x32xf32>
    %72 = arith.maximumf %66, %71 : vector<8x32xf32>
    %73 = vector.broadcast %70 : vector<8x1xf32> to vector<8x32xf32>
    %74 = arith.mulf %73, %72 : vector<8x32xf32>
    %cst_30 = arith.constant dense<0.000000e+00> : vector<8x128xf32>
    %75 = tpu.matmul %74, %14, %cst_30 {dimension_numbers = #tpu.dot_dimension_numbers<[1], [0], [0], [1], [0, 0, 1, 1], [], []>} : vector<8x32xf32>, vector<32x128xf32>, vector<8x128xf32> -> vector<8x128xf32>
    %76 = vector.broadcast %15 : vector<1x128xf32> to vector<8x128xf32>
    %77 = arith.addf %75, %76 : vector<8x128xf32>
    %c8 = arith.constant 8 : index
    %c0_31 = arith.constant 0 : index
    %78 = vector.load %arg9[%c8, %c0_31] : memref<64x128xf32, #tpu.memory_space<vmem>>, vector<8x128xf32>
    tpu.vector_store %arg9[%c8, %c0_31], %77 {strides = array<i32>} : memref<64x128xf32, #tpu.memory_space<vmem>>, vector<8x128xf32>,
    %79 = vector.extract_strided_slice %12 {offsets = [16, 0], sizes = [8, 128], strides = [1, 1]} : vector<64x128xf32> to vector<8x128xf32>
    %cst_32 = arith.constant dense<0.000000e+00> : vector<8x128xf32>
    %80 = tpu.matmul %66, %13, %cst_32 {dimension_numbers = #tpu.dot_dimension_numbers<[1], [0], [0], [1], [0, 0, 1, 1], [], []>} : vector<8x32xf32>, vector<32x128xf32>, vector<8x128xf32> -> vector<8x128xf32>
    %81 = arith.addf %79, %80 : vector<8x128xf32>
    %82 = arith.negf %81 : vector<8x128xf32>
    %83 = math.exp %82 : vector<8x128xf32>
    %cst_33 = arith.constant 1.000000e+00 : f32
    %84 = vector.broadcast %cst_33 : f32 to vector<8x128xf32>
    %85 = arith.addf %84, %83 : vector<8x128xf32>
    %86 = arith.divf %84, %85 : vector<8x128xf32>
    %87 = math.tanh %81 : vector<8x128xf32>
    %88 = vector.extract_strided_slice %86 {offsets = [0, 32], sizes = [8, 32], strides = [1, 1]} : vector<8x128xf32> to vector<8x32xf32>
    %89 = arith.mulf %88, %63 : vector<8x32xf32>
    %90 = vector.extract_strided_slice %86 {offsets = [0, 0], sizes = [8, 32], strides = [1, 1]} : vector<8x128xf32> to vector<8x32xf32>
    %91 = vector.extract_strided_slice %87 {offsets = [0, 64], sizes = [8, 32], strides = [1, 1]} : vector<8x128xf32> to vector<8x32xf32>
    %92 = arith.mulf %90, %91 : vector<8x32xf32>
    %93 = arith.addf %89, %92 : vector<8x32xf32>
    %94 = vector.extract_strided_slice %86 {offsets = [0, 96], sizes = [8, 32], strides = [1, 1]} : vector<8x128xf32> to vector<8x32xf32>
    %95 = math.tanh %93 : vector<8x32xf32>
    %96 = arith.mulf %94, %95 : vector<8x32xf32>
    %c2_i32 = arith.constant 2 : i32
    %97 = vector.broadcast %c2_i32 : i32 to vector<8x1xi32>
    %98 = arith.cmpi sgt, %16, %97 : vector<8x1xi32>
    %99 = arith.extui %98 : vector<8x1xi1> to vector<8x1xi32>
    %100 = arith.sitofp %99 : vector<8x1xi32> to vector<8x1xf32>
    %cst_34 = arith.constant 0.000000e+00 : f32
    %101 = vector.broadcast %cst_34 : f32 to vector<8x32xf32>
    %102 = arith.maximumf %96, %101 : vector<8x32xf32>
    %103 = vector.broadcast %100 : vector<8x1xf32> to vector<8x32xf32>
    %104 = arith.mulf %103, %102 : vector<8x32xf32>
    %cst_35 = arith.constant dense<0.000000e+00> : vector<8x128xf32>
    %105 = tpu.matmul %104, %14, %cst_35 {dimension_numbers = #tpu.dot_dimension_numbers<[1], [0], [0], [1], [0, 0, 1, 1], [], []>} : vector<8x32xf32>, vector<32x128xf32>, vector<8x128xf32> -> vector<8x128xf32>
    %106 = vector.broadcast %15 : vector<1x128xf32> to vector<8x128xf32>
    %107 = arith.addf %105, %106 : vector<8x128xf32>
    %c16 = arith.constant 16 : index
    %c0_36 = arith.constant 0 : index
    %108 = vector.load %arg9[%c16, %c0_36] : memref<64x128xf32, #tpu.memory_space<vmem>>, vector<8x128xf32>
    tpu.vector_store %arg9[%c16, %c0_36], %107 {strides = array<i32>} : memref<64x128xf32, #tpu.memory_space<vmem>>, vector<8x128xf32>,
    %109 = vector.extract_strided_slice %12 {offsets = [24, 0], sizes = [8, 128], strides = [1, 1]} : vector<64x128xf32> to vector<8x128xf32>
    %cst_37 = arith.constant dense<0.000000e+00> : vector<8x128xf32>
    %110 = tpu.matmul %96, %13, %cst_37 {dimension_numbers = #tpu.dot_dimension_numbers<[1], [0], [0], [1], [0, 0, 1, 1], [], []>} : vector<8x32xf32>, vector<32x128xf32>, vector<8x128xf32> -> vector<8x128xf32>
    %111 = arith.addf %109, %110 : vector<8x128xf32>
    %112 = arith.negf %111 : vector<8x128xf32>
    %113 = math.exp %112 : vector<8x128xf32>
    %cst_38 = arith.constant 1.000000e+00 : f32
    %114 = vector.broadcast %cst_38 : f32 to vector<8x128xf32>
    %115 = arith.addf %114, %113 : vector<8x128xf32>
    %116 = arith.divf %114, %115 : vector<8x128xf32>
    %117 = math.tanh %111 : vector<8x128xf32>
    %118 = vector.extract_strided_slice %116 {offsets = [0, 32], sizes = [8, 32], strides = [1, 1]} : vector<8x128xf32> to vector<8x32xf32>
    %119 = arith.mulf %118, %93 : vector<8x32xf32>
    %120 = vector.extract_strided_slice %116 {offsets = [0, 0], sizes = [8, 32], strides = [1, 1]} : vector<8x128xf32> to vector<8x32xf32>
    %121 = vector.extract_strided_slice %117 {offsets = [0, 64], sizes = [8, 32], strides = [1, 1]} : vector<8x128xf32> to vector<8x32xf32>
    %122 = arith.mulf %120, %121 : vector<8x32xf32>
    %123 = arith.addf %119, %122 : vector<8x32xf32>
    %124 = vector.extract_strided_slice %116 {offsets = [0, 96], sizes = [8, 32], strides = [1, 1]} : vector<8x128xf32> to vector<8x32xf32>
    %125 = math.tanh %123 : vector<8x32xf32>
    %126 = arith.mulf %124, %125 : vector<8x32xf32>
    %c3_i32 = arith.constant 3 : i32
    %127 = vector.broadcast %c3_i32 : i32 to vector<8x1xi32>
    %128 = arith.cmpi sgt, %16, %127 : vector<8x1xi32>
    %129 = arith.extui %128 : vector<8x1xi1> to vector<8x1xi32>
    %130 = arith.sitofp %129 : vector<8x1xi32> to vector<8x1xf32>
    %cst_39 = arith.constant 0.000000e+00 : f32
    %131 = vector.broadcast %cst_39 : f32 to vector<8x32xf32>
    %132 = arith.maximumf %126, %131 : vector<8x32xf32>
    %133 = vector.broadcast %130 : vector<8x1xf32> to vector<8x32xf32>
    %134 = arith.mulf %133, %132 : vector<8x32xf32>
    %cst_40 = arith.constant dense<0.000000e+00> : vector<8x128xf32>
    %135 = tpu.matmul %134, %14, %cst_40 {dimension_numbers = #tpu.dot_dimension_numbers<[1], [0], [0], [1], [0, 0, 1, 1], [], []>} : vector<8x32xf32>, vector<32x128xf32>, vector<8x128xf32> -> vector<8x128xf32>
    %136 = vector.broadcast %15 : vector<1x128xf32> to vector<8x128xf32>
    %137 = arith.addf %135, %136 : vector<8x128xf32>
    %c24 = arith.constant 24 : index
    %c0_41 = arith.constant 0 : index
    %138 = vector.load %arg9[%c24, %c0_41] : memref<64x128xf32, #tpu.memory_space<vmem>>, vector<8x128xf32>
    tpu.vector_store %arg9[%c24, %c0_41], %137 {strides = array<i32>} : memref<64x128xf32, #tpu.memory_space<vmem>>, vector<8x128xf32>,
    %139 = vector.extract_strided_slice %12 {offsets = [32, 0], sizes = [8, 128], strides = [1, 1]} : vector<64x128xf32> to vector<8x128xf32>
    %cst_42 = arith.constant dense<0.000000e+00> : vector<8x128xf32>
    %140 = tpu.matmul %126, %13, %cst_42 {dimension_numbers = #tpu.dot_dimension_numbers<[1], [0], [0], [1], [0, 0, 1, 1], [], []>} : vector<8x32xf32>, vector<32x128xf32>, vector<8x128xf32> -> vector<8x128xf32>
    %141 = arith.addf %139, %140 : vector<8x128xf32>
    %142 = arith.negf %141 : vector<8x128xf32>
    %143 = math.exp %142 : vector<8x128xf32>
    %cst_43 = arith.constant 1.000000e+00 : f32
    %144 = vector.broadcast %cst_43 : f32 to vector<8x128xf32>
    %145 = arith.addf %144, %143 : vector<8x128xf32>
    %146 = arith.divf %144, %145 : vector<8x128xf32>
    %147 = math.tanh %141 : vector<8x128xf32>
    %148 = vector.extract_strided_slice %146 {offsets = [0, 32], sizes = [8, 32], strides = [1, 1]} : vector<8x128xf32> to vector<8x32xf32>
    %149 = arith.mulf %148, %123 : vector<8x32xf32>
    %150 = vector.extract_strided_slice %146 {offsets = [0, 0], sizes = [8, 32], strides = [1, 1]} : vector<8x128xf32> to vector<8x32xf32>
    %151 = vector.extract_strided_slice %147 {offsets = [0, 64], sizes = [8, 32], strides = [1, 1]} : vector<8x128xf32> to vector<8x32xf32>
    %152 = arith.mulf %150, %151 : vector<8x32xf32>
    %153 = arith.addf %149, %152 : vector<8x32xf32>
    %154 = vector.extract_strided_slice %146 {offsets = [0, 96], sizes = [8, 32], strides = [1, 1]} : vector<8x128xf32> to vector<8x32xf32>
    %155 = math.tanh %153 : vector<8x32xf32>
    %156 = arith.mulf %154, %155 : vector<8x32xf32>
    %c4_i32 = arith.constant 4 : i32
    %157 = vector.broadcast %c4_i32 : i32 to vector<8x1xi32>
    %158 = arith.cmpi sgt, %16, %157 : vector<8x1xi32>
    %159 = arith.extui %158 : vector<8x1xi1> to vector<8x1xi32>
    %160 = arith.sitofp %159 : vector<8x1xi32> to vector<8x1xf32>
    %cst_44 = arith.constant 0.000000e+00 : f32
    %161 = vector.broadcast %cst_44 : f32 to vector<8x32xf32>
    %162 = arith.maximumf %156, %161 : vector<8x32xf32>
    %163 = vector.broadcast %160 : vector<8x1xf32> to vector<8x32xf32>
    %164 = arith.mulf %163, %162 : vector<8x32xf32>
    %cst_45 = arith.constant dense<0.000000e+00> : vector<8x128xf32>
    %165 = tpu.matmul %164, %14, %cst_45 {dimension_numbers = #tpu.dot_dimension_numbers<[1], [0], [0], [1], [0, 0, 1, 1], [], []>} : vector<8x32xf32>, vector<32x128xf32>, vector<8x128xf32> -> vector<8x128xf32>
    %166 = vector.broadcast %15 : vector<1x128xf32> to vector<8x128xf32>
    %167 = arith.addf %165, %166 : vector<8x128xf32>
    %c32 = arith.constant 32 : index
    %c0_46 = arith.constant 0 : index
    %168 = vector.load %arg9[%c32, %c0_46] : memref<64x128xf32, #tpu.memory_space<vmem>>, vector<8x128xf32>
    tpu.vector_store %arg9[%c32, %c0_46], %167 {strides = array<i32>} : memref<64x128xf32, #tpu.memory_space<vmem>>, vector<8x128xf32>,
    %169 = vector.extract_strided_slice %12 {offsets = [40, 0], sizes = [8, 128], strides = [1, 1]} : vector<64x128xf32> to vector<8x128xf32>
    %cst_47 = arith.constant dense<0.000000e+00> : vector<8x128xf32>
    %170 = tpu.matmul %156, %13, %cst_47 {dimension_numbers = #tpu.dot_dimension_numbers<[1], [0], [0], [1], [0, 0, 1, 1], [], []>} : vector<8x32xf32>, vector<32x128xf32>, vector<8x128xf32> -> vector<8x128xf32>
    %171 = arith.addf %169, %170 : vector<8x128xf32>
    %172 = arith.negf %171 : vector<8x128xf32>
    %173 = math.exp %172 : vector<8x128xf32>
    %cst_48 = arith.constant 1.000000e+00 : f32
    %174 = vector.broadcast %cst_48 : f32 to vector<8x128xf32>
    %175 = arith.addf %174, %173 : vector<8x128xf32>
    %176 = arith.divf %174, %175 : vector<8x128xf32>
    %177 = math.tanh %171 : vector<8x128xf32>
    %178 = vector.extract_strided_slice %176 {offsets = [0, 32], sizes = [8, 32], strides = [1, 1]} : vector<8x128xf32> to vector<8x32xf32>
    %179 = arith.mulf %178, %153 : vector<8x32xf32>
    %180 = vector.extract_strided_slice %176 {offsets = [0, 0], sizes = [8, 32], strides = [1, 1]} : vector<8x128xf32> to vector<8x32xf32>
    %181 = vector.extract_strided_slice %177 {offsets = [0, 64], sizes = [8, 32], strides = [1, 1]} : vector<8x128xf32> to vector<8x32xf32>
    %182 = arith.mulf %180, %181 : vector<8x32xf32>
    %183 = arith.addf %179, %182 : vector<8x32xf32>
    %184 = vector.extract_strided_slice %176 {offsets = [0, 96], sizes = [8, 32], strides = [1, 1]} : vector<8x128xf32> to vector<8x32xf32>
    %185 = math.tanh %183 : vector<8x32xf32>
    %186 = arith.mulf %184, %185 : vector<8x32xf32>
    %c5_i32 = arith.constant 5 : i32
    %187 = vector.broadcast %c5_i32 : i32 to vector<8x1xi32>
    %188 = arith.cmpi sgt, %16, %187 : vector<8x1xi32>
    %189 = arith.extui %188 : vector<8x1xi1> to vector<8x1xi32>
    %190 = arith.sitofp %189 : vector<8x1xi32> to vector<8x1xf32>
    %cst_49 = arith.constant 0.000000e+00 : f32
    %191 = vector.broadcast %cst_49 : f32 to vector<8x32xf32>
    %192 = arith.maximumf %186, %191 : vector<8x32xf32>
    %193 = vector.broadcast %190 : vector<8x1xf32> to vector<8x32xf32>
    %194 = arith.mulf %193, %192 : vector<8x32xf32>
    %cst_50 = arith.constant dense<0.000000e+00> : vector<8x128xf32>
    %195 = tpu.matmul %194, %14, %cst_50 {dimension_numbers = #tpu.dot_dimension_numbers<[1], [0], [0], [1], [0, 0, 1, 1], [], []>} : vector<8x32xf32>, vector<32x128xf32>, vector<8x128xf32> -> vector<8x128xf32>
    %196 = vector.broadcast %15 : vector<1x128xf32> to vector<8x128xf32>
    %197 = arith.addf %195, %196 : vector<8x128xf32>
    %c40 = arith.constant 40 : index
    %c0_51 = arith.constant 0 : index
    %198 = vector.load %arg9[%c40, %c0_51] : memref<64x128xf32, #tpu.memory_space<vmem>>, vector<8x128xf32>
    tpu.vector_store %arg9[%c40, %c0_51], %197 {strides = array<i32>} : memref<64x128xf32, #tpu.memory_space<vmem>>, vector<8x128xf32>,
    %199 = vector.extract_strided_slice %12 {offsets = [48, 0], sizes = [8, 128], strides = [1, 1]} : vector<64x128xf32> to vector<8x128xf32>
    %cst_52 = arith.constant dense<0.000000e+00> : vector<8x128xf32>
    %200 = tpu.matmul %186, %13, %cst_52 {dimension_numbers = #tpu.dot_dimension_numbers<[1], [0], [0], [1], [0, 0, 1, 1], [], []>} : vector<8x32xf32>, vector<32x128xf32>, vector<8x128xf32> -> vector<8x128xf32>
    %201 = arith.addf %199, %200 : vector<8x128xf32>
    %202 = arith.negf %201 : vector<8x128xf32>
    %203 = math.exp %202 : vector<8x128xf32>
    %cst_53 = arith.constant 1.000000e+00 : f32
    %204 = vector.broadcast %cst_53 : f32 to vector<8x128xf32>
    %205 = arith.addf %204, %203 : vector<8x128xf32>
    %206 = arith.divf %204, %205 : vector<8x128xf32>
    %207 = math.tanh %201 : vector<8x128xf32>
    %208 = vector.extract_strided_slice %206 {offsets = [0, 32], sizes = [8, 32], strides = [1, 1]} : vector<8x128xf32> to vector<8x32xf32>
    %209 = arith.mulf %208, %183 : vector<8x32xf32>
    %210 = vector.extract_strided_slice %206 {offsets = [0, 0], sizes = [8, 32], strides = [1, 1]} : vector<8x128xf32> to vector<8x32xf32>
    %211 = vector.extract_strided_slice %207 {offsets = [0, 64], sizes = [8, 32], strides = [1, 1]} : vector<8x128xf32> to vector<8x32xf32>
    %212 = arith.mulf %210, %211 : vector<8x32xf32>
    %213 = arith.addf %209, %212 : vector<8x32xf32>
    %214 = vector.extract_strided_slice %206 {offsets = [0, 96], sizes = [8, 32], strides = [1, 1]} : vector<8x128xf32> to vector<8x32xf32>
    %215 = math.tanh %213 : vector<8x32xf32>
    %216 = arith.mulf %214, %215 : vector<8x32xf32>
    %c6_i32 = arith.constant 6 : i32
    %217 = vector.broadcast %c6_i32 : i32 to vector<8x1xi32>
    %218 = arith.cmpi sgt, %16, %217 : vector<8x1xi32>
    %219 = arith.extui %218 : vector<8x1xi1> to vector<8x1xi32>
    %220 = arith.sitofp %219 : vector<8x1xi32> to vector<8x1xf32>
    %cst_54 = arith.constant 0.000000e+00 : f32
    %221 = vector.broadcast %cst_54 : f32 to vector<8x32xf32>
    %222 = arith.maximumf %216, %221 : vector<8x32xf32>
    %223 = vector.broadcast %220 : vector<8x1xf32> to vector<8x32xf32>
    %224 = arith.mulf %223, %222 : vector<8x32xf32>
    %cst_55 = arith.constant dense<0.000000e+00> : vector<8x128xf32>
    %225 = tpu.matmul %224, %14, %cst_55 {dimension_numbers = #tpu.dot_dimension_numbers<[1], [0], [0], [1], [0, 0, 1, 1], [], []>} : vector<8x32xf32>, vector<32x128xf32>, vector<8x128xf32> -> vector<8x128xf32>
    %226 = vector.broadcast %15 : vector<1x128xf32> to vector<8x128xf32>
    %227 = arith.addf %225, %226 : vector<8x128xf32>
    %c48 = arith.constant 48 : index
    %c0_56 = arith.constant 0 : index
    %228 = vector.load %arg9[%c48, %c0_56] : memref<64x128xf32, #tpu.memory_space<vmem>>, vector<8x128xf32>
    tpu.vector_store %arg9[%c48, %c0_56], %227 {strides = array<i32>} : memref<64x128xf32, #tpu.memory_space<vmem>>, vector<8x128xf32>,
    %229 = vector.extract_strided_slice %12 {offsets = [56, 0], sizes = [8, 128], strides = [1, 1]} : vector<64x128xf32> to vector<8x128xf32>
    %cst_57 = arith.constant dense<0.000000e+00> : vector<8x128xf32>
    %230 = tpu.matmul %216, %13, %cst_57 {dimension_numbers = #tpu.dot_dimension_numbers<[1], [0], [0], [1], [0, 0, 1, 1], [], []>} : vector<8x32xf32>, vector<32x128xf32>, vector<8x128xf32> -> vector<8x128xf32>
    %231 = arith.addf %229, %230 : vector<8x128xf32>
    %232 = arith.negf %231 : vector<8x128xf32>
    %233 = math.exp %232 : vector<8x128xf32>
    %cst_58 = arith.constant 1.000000e+00 : f32
    %234 = vector.broadcast %cst_58 : f32 to vector<8x128xf32>
    %235 = arith.addf %234, %233 : vector<8x128xf32>
    %236 = arith.divf %234, %235 : vector<8x128xf32>
    %237 = math.tanh %231 : vector<8x128xf32>
    %238 = vector.extract_strided_slice %236 {offsets = [0, 32], sizes = [8, 32], strides = [1, 1]} : vector<8x128xf32> to vector<8x32xf32>
    %239 = arith.mulf %238, %213 : vector<8x32xf32>
    %240 = vector.extract_strided_slice %236 {offsets = [0, 0], sizes = [8, 32], strides = [1, 1]} : vector<8x128xf32> to vector<8x32xf32>
    %241 = vector.extract_strided_slice %237 {offsets = [0, 64], sizes = [8, 32], strides = [1, 1]} : vector<8x128xf32> to vector<8x32xf32>
    %242 = arith.mulf %240, %241 : vector<8x32xf32>
    %243 = arith.addf %239, %242 : vector<8x32xf32>
    %244 = vector.extract_strided_slice %236 {offsets = [0, 96], sizes = [8, 32], strides = [1, 1]} : vector<8x128xf32> to vector<8x32xf32>
    %245 = math.tanh %243 : vector<8x32xf32>
    %246 = arith.mulf %244, %245 : vector<8x32xf32>
    %c7_i32 = arith.constant 7 : i32
    %247 = vector.broadcast %c7_i32 : i32 to vector<8x1xi32>
    %248 = arith.cmpi sgt, %16, %247 : vector<8x1xi32>
    %249 = arith.extui %248 : vector<8x1xi1> to vector<8x1xi32>
    %250 = arith.sitofp %249 : vector<8x1xi32> to vector<8x1xf32>
    %cst_59 = arith.constant 0.000000e+00 : f32
    %251 = vector.broadcast %cst_59 : f32 to vector<8x32xf32>
    %252 = arith.maximumf %246, %251 : vector<8x32xf32>
    %253 = vector.broadcast %250 : vector<8x1xf32> to vector<8x32xf32>
    %254 = arith.mulf %253, %252 : vector<8x32xf32>
    %cst_60 = arith.constant dense<0.000000e+00> : vector<8x128xf32>
    %255 = tpu.matmul %254, %14, %cst_60 {dimension_numbers = #tpu.dot_dimension_numbers<[1], [0], [0], [1], [0, 0, 1, 1], [], []>} : vector<8x32xf32>, vector<32x128xf32>, vector<8x128xf32> -> vector<8x128xf32>
    %256 = vector.broadcast %15 : vector<1x128xf32> to vector<8x128xf32>
    %257 = arith.addf %255, %256 : vector<8x128xf32>
    %c56 = arith.constant 56 : index
    %c0_61 = arith.constant 0 : index
    %258 = vector.load %arg9[%c56, %c0_61] : memref<64x128xf32, #tpu.memory_space<vmem>>, vector<8x128xf32>
    tpu.vector_store %arg9[%c56, %c0_61], %257 {strides = array<i32>} : memref<64x128xf32, #tpu.memory_space<vmem>>, vector<8x128xf32>,
    return
  }
}

</mosaic_0001>

<llo_original>
// kernel: tpu_custom_call.1
$region0: #{tpu_custom_call.1}
  #allocation0 [shape = 'u32[]', space=smem, size = 0x4, offset = 0x4, fixed_abs, tag = 'smem constant byte address 0x4 - core index']
  #allocation1 [shape = 'u32[144,128]{1,0:T(1,128)}', space=vmem, size = 0x12000, scoped, tag = 'internal scratch']
  %s0 = inlined_call_operand.vmem [shape: f32[64,24], index: 0, kind: input, shape index: {}]
  %s1 = inlined_call_operand.vmem [shape: s32[8,1], index: 1, kind: input, shape index: {}]
  %s2 = inlined_call_operand.hbm [shape: f32[24,32], index: 2, kind: input, shape index: {}]
  %s3 = inlined_call_operand.vmem [shape: f32[1,32], index: 3, kind: input, shape index: {}]
  %s4 = inlined_call_operand.vmem [shape: f32[32,128], index: 4, kind: input, shape index: {}]
  %s5 = inlined_call_operand.vmem [shape: f32[32,128], index: 5, kind: input, shape index: {}]
  %s6 = inlined_call_operand.vmem [shape: f32[1,128], index: 6, kind: input, shape index: {}]
  %s7 = inlined_call_operand.vmem [shape: f32[32,128], index: 7, kind: input, shape index: {}]
  %s8 = inlined_call_operand.vmem [shape: f32[1,128], index: 8, kind: input, shape index: {}]
  %s9 = inlined_call_operand.hbm [shape: f32[64,128], index: 9, kind: output, shape index: {}]
  %s10 = sld [smem:[#allocation0]]
  $region50: #{tpu_custom_call.1} parent=0
    _
  %s12 = ssub.s32 1, %s10
  %s13 = scalar_select 0, %s12, %s10
  $region1: #{tpu_custom_call.1} parent=0
    #allocation2 [shape = 'u8[12288]{0}', space=vmem, size = 0x3000, scoped, tag = 'input window, operand 2, single buffered']
    #allocation3 [shape = 's32[1]{0}', space=sflag, size = 0x4, scoped, tag = 'scoped memory for tpu_custom_call.1']
    #allocation4 [shape = 's32[1]{0}', space=sflag, size = 0x4, scoped, tag = 'scoped memory for tpu_custom_call.1']
    #allocation5 [shape = 'u8[32768]{0}', space=vmem, size = 0x8000, scoped, tag = 'output window, operand 0, single buffered']
    %14 = vsyncpa [#allocation3], 0
    %15 = vsyncpa [#allocation4], 0
    // Predicated region
    $region2: #{tpu_custom_call.1} parent=1 // pred_check
      _
    $region3: #{tpu_custom_call.1} parent=1 // pred_check_branch
      %17 = sbr.rel (0) target = $region5
    $region4: #{tpu_custom_call.1} parent=1 // pred_region
      _
    $region5: #{tpu_custom_call.1} parent=1 // pred_fallthru
      _
    // Predicated region
    $region6: #{tpu_custom_call.1} parent=1 // pred_check
      _
    $region7: #{tpu_custom_call.1} parent=1 // pred_check_branch
      %19 = sbr.rel (0) target = $region9
    $region8: #{tpu_custom_call.1} parent=1 // pred_region
      _
    $region9: #{tpu_custom_call.1} parent=1 // pred_fallthru
      _
    // Predicated region
    $region10: #{tpu_custom_call.1} parent=1 // pred_check
      _
    $region11: #{tpu_custom_call.1} parent=1 // pred_check_branch
      %21 = sbr.rel (0) target = $region13
    $region12: #{tpu_custom_call.1} parent=1 // pred_region
      %s23 = ssub.s32 384, 384
      %24 = vsyncadd [#allocation3], %s23
      %s25 = sshll.u32 [#allocation2], 4
      %s26 = int_to_ptr.vmem [resolvable:$true] %s25
      %31 = dma.hbm_to_vmem [thread:$0]  %s2, 384, %s26, [#allocation3], 128, 128, 8
    $region13: #{tpu_custom_call.1} parent=1 // pred_fallthru
      _
    // Predicated region
    $region14: #{tpu_custom_call.1} parent=1 // pred_check
      _
    $region15: #{tpu_custom_call.1} parent=1 // pred_check_branch
      %33 = sbr.rel (0) target = $region17
    $region16: #{tpu_custom_call.1} parent=1 // pred_region
      _
    $region17: #{tpu_custom_call.1} parent=1 // pred_fallthru
      _
    // Predicated region
    $region18: #{tpu_custom_call.1} parent=1 // pred_check
      _
    $region19: #{tpu_custom_call.1} parent=1 // pred_check_branch
      %35 = sbr.rel (0) target = $region21
    $region20: #{tpu_custom_call.1} parent=1 // pred_region
      _
    $region21: #{tpu_custom_call.1} parent=1 // pred_fallthru
      _
    // Predicated region
    $region22: #{tpu_custom_call.1} parent=1 // pred_check
      _
    $region23: #{tpu_custom_call.1} parent=1 // pred_check_branch
      %37 = sbr.rel (0) target = $region25
    $region24: #{tpu_custom_call.1} parent=1 // pred_region
      _
    $region25: #{tpu_custom_call.1} parent=1 // pred_fallthru
      _
    // Predicated region
    $region26: #{tpu_custom_call.1} parent=1 // pred_check
      _
    $region27: #{tpu_custom_call.1} parent=1 // pred_check_branch
      %39 = sbr.rel (0) target = $region29
    $region28: #{tpu_custom_call.1} parent=1 // pred_region
      _
    $region29: #{tpu_custom_call.1} parent=1 // pred_fallthru
      _
    // Predicated region
    $region30: #{tpu_custom_call.1} parent=1 // pred_check
      _
    $region31: #{tpu_custom_call.1} parent=1 // pred_check_branch
      %41 = sbr.rel (0) target = $region33
    $region32: #{tpu_custom_call.1} parent=1 // pred_region
      _
    $region33: #{tpu_custom_call.1} parent=1 // pred_fallthru
      _
    // Predicated region
    $region34: #{tpu_custom_call.1} parent=1 // pred_check
      _
    $region35: #{tpu_custom_call.1} parent=1 // pred_check_branch
      %43 = sbr.rel (0) target = $region37
    $region36: #{tpu_custom_call.1} parent=1 // pred_region
      _
    $region37: #{tpu_custom_call.1} parent=1 // pred_fallthru
      _
    // Predicated region
    $region38: #{tpu_custom_call.1} parent=1 // pred_check
      _
    $region39: #{tpu_custom_call.1} parent=1 // pred_check_branch
      %45 = sbr.rel (0) target = $region41
    $region40: #{tpu_custom_call.1} parent=1 // pred_region
      %46 = dma.done [#allocation3], 384
    $region41: #{tpu_custom_call.1} parent=1 // pred_fallthru
      _
    %v47 = vld [vmem:[%s0] sm:$0xff]
    %v48 = vld [vmem:[%s0 + $0x8] sm:$0xff]
    %v49 = vld [vmem:[%s0 + $0x10] sm:$0xff]
    %v50 = vld [vmem:[%s0 + $0x18] sm:$0xff]
    %v51 = vld [vmem:[%s0 + $0x20] sm:$0xff]
    %v52 = vld [vmem:[%s0 + $0x28] sm:$0xff]
    %v53 = vld [vmem:[%s0 + $0x30] sm:$0xff]
    %v54 = vld [vmem:[%s0 + $0x38] sm:$0xff]
    %v55 = vld [vmem:[#allocation2] sm:$0xff]
    %v56 = vld [vmem:[#allocation2 + $0x8] sm:$0xff]
    %v57 = vld [vmem:[#allocation2 + $0x10] sm:$0xff]
    %v58 = vld [vmem:[%s3] sm:$0x1]
    %v60 = vlaneseq
    %v61 = vshrl.u32 %v60, 7
    %v62 = vsub.s32 0, %v61
    %v63 = vrot.slane %v58, %v62
    %vm65 = vcmask 195584
    %v67 = vsel %vm65, %v47, 0
    %v70 = vsel %vm65, %v48, 0
    %v73 = vsel %vm65, %v49, 0
    %v76 = vsel %vm65, %v50, 0
    %v79 = vsel %vm65, %v51, 0
    %v82 = vsel %vm65, %v52, 0
    %v85 = vsel %vm65, %v53, 0
    %v88 = vsel %vm65, %v54, 0
    %90 = vmatprep.subr.mxu0 0.0
    %91 = vmatpush1.msra.mxu0 %v55
    %92 = vmatprep.subr.mxu0 0.0
    %93 = vmatpush1.msra.mxu0 %v56
    %94 = vmatprep.subr.mxu0 0.0
    %95 = vmatpush1.msra.mxu0 %v57
    %96 = vmatprep.subr.mxu0 0.0
    %97 = vmatpush1.msra.mxu0 0.0
    %98 = vmatprep.subr.mxu0 0.0
    %99 = vmatpush1.msra.mxu0 0.0
    %100 = vmatprep.subr.mxu0 0.0
    %101 = vmatpush1.msra.mxu0 0.0
    %102 = vmatprep.subr.mxu0 0.0
    %103 = vmatpush1.msra.mxu0 0.0
    %104 = vmatprep.subr.mxu0 0.0
    %105 = vmatpush1.msra.mxu0 0.0
    %106 = vmatprep.subr.mxu0 0.0
    %107 = vmatpush1.msra.mxu0 0.0
    %108 = vmatprep.subr.mxu0 0.0
    %109 = vmatpush1.msra.mxu0 0.0
    %110 = vmatprep.subr.mxu0 0.0
    %111 = vmatpush1.msra.mxu0 0.0
    %112 = vmatprep.subr.mxu0 0.0
    %113 = vmatpush1.msra.mxu0 0.0
    %114 = vmatprep.subr.mxu0 0.0
    %115 = vmatpush1.msra.mxu0 0.0
    %116 = vmatprep.subr.mxu0 0.0
    %117 = vmatpush1.msra.mxu0 0.0
    %118 = vmatprep.subr.mxu0 0.0
    %119 = vmatpush1.msra.mxu0 0.0
    %120 = vmatprep.subr.mxu0 0.0
    %121 = vmatpush1.msra.mxu0 0.0
    %122 = vmatprep.subr.mxu0 0.0
    %123 = vmatpush1.msra.mxu0 0.0
    %124 = vmatprep.subr.mxu0 0.0
    %125 = vmatpush1.msra.mxu0 0.0
    %126 = vmatprep.subr.mxu0 0.0
    %127 = vmatpush1.msra.mxu0 0.0
    %128 = vmatprep.subr.mxu0 0.0
    %129 = vmatpush1.msra.mxu0 0.0
    %130 = vmatprep.subr.mxu0 0.0
    %131 = vmatpush1.msra.mxu0 0.0
    %132 = vmatprep.subr.mxu0 0.0
    %133 = vmatpush1.msra.mxu0 0.0
    %134 = vmatprep.subr.mxu0 0.0
    %135 = vmatpush1.msra.mxu0 0.0
    %136 = vmatprep.subr.mxu0 0.0
    %137 = vmatpush1.msra.mxu0 0.0
    %138 = vmatprep.subr.mxu0 0.0
    %139 = vmatpush1.msra.mxu0 0.0
    %140 = vmatprep.subr.mxu0 0.0
    %141 = vmatpush1.msra.mxu0 0.0
    %142 = vmatprep.subr.mxu0 0.0
    %143 = vmatpush1.msra.mxu0 0.0
    %144 = vmatprep.subr.mxu0 0.0
    %145 = vmatpush1.msra.mxu0 0.0
    %146 = vmatprep.subr.mxu0 0.0
    %147 = vmatpush1.msra.mxu0 0.0
    %148 = vmatprep.subr.mxu0 0.0
    %149 = vmatpush1.msra.mxu0 0.0
    %150 = vmatprep.subr.mxu0 0.0
    %151 = vmatpush1.msra.mxu0 0.0
    %152 = vmatprep.subr.mxu0 0.0
    %153 = vmatpush1.msra.mxu0 0.0
    %154 = vmatprep.mubr.f32.mxu0 0.0
    %155 = vmatmul.mubr.f32.gmra.mrb[0].mxu0 %v67
    %v156 = vpop.f32.mrb[0].mxu0
    %v157 = vadd.f32 %v63, %v156
    %v158 = vpop.f32.mrb[0].mxu0
    %159 = vmatprep.mubr.f32.mxu0 0.0
    %160 = vmatmul.mubr.f32.gmra.mrb[0].mxu0 %v70
    %v161 = vpop.f32.mrb[0].mxu0
    %v162 = vadd.f32 %v63, %v161
    %v163 = vpop.f32.mrb[0].mxu0
    %164 = vmatprep.mubr.f32.mxu0 0.0
    %165 = vmatmul.mubr.f32.gmra.mrb[0].mxu0 %v73
    %v166 = vpop.f32.mrb[0].mxu0
    %v167 = vadd.f32 %v63, %v166
    %v168 = vpop.f32.mrb[0].mxu0
    %169 = vmatprep.mubr.f32.mxu0 0.0
    %170 = vmatmul.mubr.f32.gmra.mrb[0].mxu0 %v76
    %v171 = vpop.f32.mrb[0].mxu0
    %v172 = vadd.f32 %v63, %v171
    %v173 = vpop.f32.mrb[0].mxu0
    %174 = vmatprep.mubr.f32.mxu0 0.0
    %175 = vmatmul.mubr.f32.gmra.mrb[0].mxu0 %v79
    %v176 = vpop.f32.mrb[0].mxu0
    %v177 = vadd.f32 %v63, %v176
    %v178 = vpop.f32.mrb[0].mxu0
    %179 = vmatprep.mubr.f32.mxu0 0.0
    %180 = vmatmul.mubr.f32.gmra.mrb[0].mxu0 %v82
    %v181 = vpop.f32.mrb[0].mxu0
    %v182 = vadd.f32 %v63, %v181
    %v183 = vpop.f32.mrb[0].mxu0
    %184 = vmatprep.mubr.f32.mxu0 0.0
    %185 = vmatmul.mubr.f32.gmra.mrb[0].mxu0 %v85
    %v186 = vpop.f32.mrb[0].mxu0
    %v187 = vadd.f32 %v63, %v186
    %v188 = vpop.f32.mrb[0].mxu0
    %189 = vmatprep.mubr.f32.mxu0 0.0
    %190 = vmatmul.mubr.f32.gmra.mrb[0].mxu0 %v88
    %v191 = vpop.f32.mrb[0].mxu0
    %v192 = vadd.f32 %v63, %v191
    %v193 = vpop.f32.mrb[0].mxu0
    %194 = vdwg.mxu0
    %v195 = vmax.f32 %v157, 0.0
    %v196 = vmax.f32 %v162, 0.0
    %v197 = vmax.f32 %v167, 0.0
    %v198 = vmax.f32 %v172, 0.0
    %v199 = vmax.f32 %v177, 0.0
    %v200 = vmax.f32 %v182, 0.0
    %v201 = vmax.f32 %v187, 0.0
    %v202 = vmax.f32 %v192, 0.0
    %v203 = vld [vmem:[%s4] sm:$0xff]
    %v204 = vld [vmem:[%s4 + $0x8] sm:$0xff]
    %v205 = vld [vmem:[%s4 + $0x10] sm:$0xff]
    %v206 = vld [vmem:[%s4 + $0x18] sm:$0xff]
    %v207 = vld [vmem:[%s6] sm:$0x1]
    %v209 = vlaneseq
    %v210 = vshrl.u32 %v209, 7
    %v211 = vsub.s32 0, %v210
    %v212 = vrot.slane %v207, %v211
    %vm214 = vcmask 261120
    %v216 = vsel %vm214, %v195, 0
    %v219 = vsel %vm214, %v196, 0
    %v222 = vsel %vm214, %v197, 0
    %v225 = vsel %vm214, %v198, 0
    %v228 = vsel %vm214, %v199, 0
    %v231 = vsel %vm214, %v200, 0
    %v234 = vsel %vm214, %v201, 0
    %v237 = vsel %vm214, %v202, 0
    %239 = vmatprep.subr.mxu0 0.0
    %240 = vmatpush1.msra.mxu0 %v203
    %241 = vmatprep.subr.mxu0 0.0
    %242 = vmatpush1.msra.mxu0 %v204
    %243 = vmatprep.subr.mxu0 0.0
    %244 = vmatpush1.msra.mxu0 %v205
    %245 = vmatprep.subr.mxu0 0.0
    %246 = vmatpush1.msra.mxu0 %v206
    %247 = vmatprep.subr.mxu0 0.0
    %248 = vmatpush1.msra.mxu0 0.0
    %249 = vmatprep.subr.mxu0 0.0
    %250 = vmatpush1.msra.mxu0 0.0
    %251 = vmatprep.subr.mxu0 0.0
    %252 = vmatpush1.msra.mxu0 0.0
    %253 = vmatprep.subr.mxu0 0.0
    %254 = vmatpush1.msra.mxu0 0.0
    %255 = vmatprep.subr.mxu0 0.0
    %256 = vmatpush1.msra.mxu0 0.0
    %257 = vmatprep.subr.mxu0 0.0
    %258 = vmatpush1.msra.mxu0 0.0
    %259 = vmatprep.subr.mxu0 0.0
    %260 = vmatpush1.msra.mxu0 0.0
    %261 = vmatprep.subr.mxu0 0.0
    %262 = vmatpush1.msra.mxu0 0.0
    %263 = vmatprep.subr.mxu0 0.0
    %264 = vmatpush1.msra.mxu0 0.0
    %265 = vmatprep.subr.mxu0 0.0
    %266 = vmatpush1.msra.mxu0 0.0
    %267 = vmatprep.subr.mxu0 0.0
    %268 = vmatpush1.msra.mxu0 0.0
    %269 = vmatprep.subr.mxu0 0.0
    %270 = vmatpush1.msra.mxu0 0.0
    %271 = vmatprep.subr.mxu0 0.0
    %272 = vmatpush1.msra.mxu0 0.0
    %273 = vmatprep.subr.mxu0 0.0
    %274 = vmatpush1.msra.mxu0 0.0
    %275 = vmatprep.subr.mxu0 0.0
    %276 = vmatpush1.msra.mxu0 0.0
    %277 = vmatprep.subr.mxu0 0.0
    %278 = vmatpush1.msra.mxu0 0.0
    %279 = vmatprep.subr.mxu0 0.0
    %280 = vmatpush1.msra.mxu0 0.0
    %281 = vmatprep.subr.mxu0 0.0
    %282 = vmatpush1.msra.mxu0 0.0
    %283 = vmatprep.subr.mxu0 0.0
    %284 = vmatpush1.msra.mxu0 0.0
    %285 = vmatprep.subr.mxu0 0.0
    %286 = vmatpush1.msra.mxu0 0.0
    %287 = vmatprep.subr.mxu0 0.0
    %288 = vmatpush1.msra.mxu0 0.0
    %289 = vmatprep.subr.mxu0 0.0
    %290 = vmatpush1.msra.mxu0 0.0
    %291 = vmatprep.subr.mxu0 0.0
    %292 = vmatpush1.msra.mxu0 0.0
    %293 = vmatprep.subr.mxu0 0.0
    %294 = vmatpush1.msra.mxu0 0.0
    %295 = vmatprep.subr.mxu0 0.0
    %296 = vmatpush1.msra.mxu0 0.0
    %297 = vmatprep.subr.mxu0 0.0
    %298 = vmatpush1.msra.mxu0 0.0
    %299 = vmatprep.subr.mxu0 0.0
    %300 = vmatpush1.msra.mxu0 0.0
    %301 = vmatprep.subr.mxu0 0.0
    %302 = vmatpush1.msra.mxu0 0.0
    %303 = vmatprep.mubr.f32.mxu0 0.0
    %304 = vmatmul.mubr.f32.gmra.mrb[0].mxu0 %v216
    %v305 = vpop.f32.mrb[0].mxu0
    %v306 = vadd.f32 %v212, %v305
    %v307 = vpop.f32.mrb[0].mxu0
    %308 = vmatprep.mubr.f32.mxu0 0.0
    %309 = vmatmul.mubr.f32.gmra.mrb[0].mxu0 %v219
    %v310 = vpop.f32.mrb[0].mxu0
    %v311 = vadd.f32 %v212, %v310
    %v312 = vpop.f32.mrb[0].mxu0
    %313 = vmatprep.mubr.f32.mxu0 0.0
    %314 = vmatmul.mubr.f32.gmra.mrb[0].mxu0 %v222
    %v315 = vpop.f32.mrb[0].mxu0
    %v316 = vadd.f32 %v212, %v315
    %v317 = vpop.f32.mrb[0].mxu0
    %318 = vmatprep.mubr.f32.mxu0 0.0
    %319 = vmatmul.mubr.f32.gmra.mrb[0].mxu0 %v225
    %v320 = vpop.f32.mrb[0].mxu0
    %v321 = vadd.f32 %v212, %v320
    %v322 = vpop.f32.mrb[0].mxu0
    %323 = vmatprep.mubr.f32.mxu0 0.0
    %324 = vmatmul.mubr.f32.gmra.mrb[0].mxu0 %v228
    %v325 = vpop.f32.mrb[0].mxu0
    %v326 = vadd.f32 %v212, %v325
    %v327 = vpop.f32.mrb[0].mxu0
    %328 = vmatprep.mubr.f32.mxu0 0.0
    %329 = vmatmul.mubr.f32.gmra.mrb[0].mxu0 %v231
    %v330 = vpop.f32.mrb[0].mxu0
    %v331 = vadd.f32 %v212, %v330
    %v332 = vpop.f32.mrb[0].mxu0
    %333 = vmatprep.mubr.f32.mxu0 0.0
    %334 = vmatmul.mubr.f32.gmra.mrb[0].mxu0 %v234
    %v335 = vpop.f32.mrb[0].mxu0
    %v336 = vadd.f32 %v212, %v335
    %v337 = vpop.f32.mrb[0].mxu0
    %338 = vmatprep.mubr.f32.mxu0 0.0
    %339 = vmatmul.mubr.f32.gmra.mrb[0].mxu0 %v237
    %v340 = vpop.f32.mrb[0].mxu0
    %v341 = vadd.f32 %v212, %v340
    %v342 = vpop.f32.mrb[0].mxu0
    %343 = vdwg.mxu0
    %v344 = vld [vmem:[%s5] sm:$0xff]
    %v345 = vld [vmem:[%s5 + $0x8] sm:$0xff]
    %v346 = vld [vmem:[%s5 + $0x10] sm:$0xff]
    %v347 = vld [vmem:[%s5 + $0x18] sm:$0xff]
    %v348 = vld [vmem:[%s7] sm:$0xff]
    %v349 = vld [vmem:[%s7 + $0x8] sm:$0xff]
    %v350 = vld [vmem:[%s7 + $0x10] sm:$0xff]
    %v351 = vld [vmem:[%s7 + $0x18] sm:$0xff]
    %v352 = vld [vmem:[%s8] sm:$0x1]
    %v353 = vld [vmem:[%s1] sm:$0xff]
    %v355 = vsel %vm214, 0.0, 0
    %357 = vmatprep.subr.mxu0 0.0
    %358 = vmatpush1.msra.mxu0 %v344
    %359 = vmatprep.subr.mxu0 0.0
    %360 = vmatpush1.msra.mxu0 %v345
    %361 = vmatprep.subr.mxu0 0.0
    %362 = vmatpush1.msra.mxu0 %v346
    %363 = vmatprep.subr.mxu0 0.0
    %364 = vmatpush1.msra.mxu0 %v347
    %365 = vmatprep.subr.mxu0 0.0
    %366 = vmatpush1.msra.mxu0 0.0
    %367 = vmatprep.subr.mxu0 0.0
    %368 = vmatpush1.msra.mxu0 0.0
    %369 = vmatprep.subr.mxu0 0.0
    %370 = vmatpush1.msra.mxu0 0.0
    %371 = vmatprep.subr.mxu0 0.0
    %372 = vmatpush1.msra.mxu0 0.0
    %373 = vmatprep.subr.mxu0 0.0
    %374 = vmatpush1.msra.mxu0 0.0
    %375 = vmatprep.subr.mxu0 0.0
    %376 = vmatpush1.msra.mxu0 0.0
    %377 = vmatprep.subr.mxu0 0.0
    %378 = vmatpush1.msra.mxu0 0.0
    %379 = vmatprep.subr.mxu0 0.0
    %380 = vmatpush1.msra.mxu0 0.0
    %381 = vmatprep.subr.mxu0 0.0
    %382 = vmatpush1.msra.mxu0 0.0
    %383 = vmatprep.subr.mxu0 0.0
    %384 = vmatpush1.msra.mxu0 0.0
    %385 = vmatprep.subr.mxu0 0.0
    %386 = vmatpush1.msra.mxu0 0.0
    %387 = vmatprep.subr.mxu0 0.0
    %388 = vmatpush1.msra.mxu0 0.0
    %389 = vmatprep.subr.mxu0 0.0
    %390 = vmatpush1.msra.mxu0 0.0
    %391 = vmatprep.subr.mxu0 0.0
    %392 = vmatpush1.msra.mxu0 0.0
    %393 = vmatprep.subr.mxu0 0.0
    %394 = vmatpush1.msra.mxu0 0.0
    %395 = vmatprep.subr.mxu0 0.0
    %396 = vmatpush1.msra.mxu0 0.0
    %397 = vmatprep.subr.mxu0 0.0
    %398 = vmatpush1.msra.mxu0 0.0
    %399 = vmatprep.subr.mxu0 0.0
    %400 = vmatpush1.msra.mxu0 0.0
    %401 = vmatprep.subr.mxu0 0.0
    %402 = vmatpush1.msra.mxu0 0.0
    %403 = vmatprep.subr.mxu0 0.0
    %404 = vmatpush1.msra.mxu0 0.0
    %405 = vmatprep.subr.mxu0 0.0
    %406 = vmatpush1.msra.mxu0 0.0
    %407 = vmatprep.subr.mxu0 0.0
    %408 = vmatpush1.msra.mxu0 0.0
    %409 = vmatprep.subr.mxu0 0.0
    %410 = vmatpush1.msra.mxu0 0.0
    %411 = vmatprep.subr.mxu0 0.0
    %412 = vmatpush1.msra.mxu0 0.0
    %413 = vmatprep.subr.mxu0 0.0
    %414 = vmatpush1.msra.mxu0 0.0
    %415 = vmatprep.subr.mxu0 0.0
    %416 = vmatpush1.msra.mxu0 0.0
    %417 = vmatprep.subr.mxu0 0.0
    %418 = vmatpush1.msra.mxu0 0.0
    %419 = vmatprep.subr.mxu0 0.0
    %420 = vmatpush1.msra.mxu0 0.0
    %421 = vmatprep.mubr.f32.mxu0 0.0
    %422 = vmatmul.mubr.f32.gmra.mrb[0].mxu0 %v355
    %v423 = vpop.f32.mrb[0].mxu0
    %v424 = vadd.f32 0.0, %v423
    %v425 = vpop.f32.mrb[0].mxu0
    %426 = vdwg.mxu0
    %v427 = vadd.f32 %v306, %v424
    %v428 = vxor.u32 %v427, 2147483648
    %v429 = vmul.f32 %v428, 1.442695
    %v430 = vpow.pop %v429
    %v431 = vadd.f32 %v430, 1.0
    %v432 = vrcp.pop %v431
    %v433 = vmul.f32 1.0, %v432
    %v434 = vtanh.pop %v427
    %v435 = vmul.f32 %v433, 0.0
    %437 = vrot.lane.b32.xlu0 %v434, 64
    %v438 = vpop.permute.xlu0 %437
    %v440 = vmul.f32 %v433, %v438
    %442 = vrot.lane.b32.xlu0 %v440, 32
    %v443 = vpop.permute.xlu0 %442
    %v445 = vadd.f32 %v435, %v443
    %v446 = vtanh.pop %v445
    %448 = vrot.lane.b32.xlu0 %v446, 64
    %v449 = vpop.permute.xlu0 %448
    %v451 = vmul.f32 %v433, %v449
    %vm452 = vcmp.gt.s32.totalorder %v353, 0
    %v453 = vsel %vm452, 1, 0
    %v454 = vcvt.s32.f32 %v453
    %v455 = vmax.f32 %v451, 0.0
    %457 = vset.pattern.permute.xlu0 0
    %458 = vperm.xlu0 %457, %v454
    %v459 = vpop.permute.xlu0 %458
    %v461 = vmul.f32 %v459, %v455
    %v463 = vlaneseq
    %v464 = vshrl.u32 %v463, 7
    %v465 = vsub.s32 0, %v464
    %v466 = vrot.slane %v352, %v465
    %469 = vrot.lane.b32.xlu0 %v461, 32
    %v470 = vpop.permute.xlu0 %469
    %v471 = vsel %vm214, %v470, 0
    %473 = vmatprep.subr.mxu0 0.0
    %474 = vmatpush1.msra.mxu0 %v348
    %475 = vmatprep.subr.mxu0 0.0
    %476 = vmatpush1.msra.mxu0 %v349
    %477 = vmatprep.subr.mxu0 0.0
    %478 = vmatpush1.msra.mxu0 %v350
    %479 = vmatprep.subr.mxu0 0.0
    %480 = vmatpush1.msra.mxu0 %v351
    %481 = vmatprep.subr.mxu0 0.0
    %482 = vmatpush1.msra.mxu0 0.0
    %483 = vmatprep.subr.mxu0 0.0
    %484 = vmatpush1.msra.mxu0 0.0
    %485 = vmatprep.subr.mxu0 0.0
    %486 = vmatpush1.msra.mxu0 0.0
    %487 = vmatprep.subr.mxu0 0.0
    %488 = vmatpush1.msra.mxu0 0.0
    %489 = vmatprep.subr.mxu0 0.0
    %490 = vmatpush1.msra.mxu0 0.0
    %491 = vmatprep.subr.mxu0 0.0
    %492 = vmatpush1.msra.mxu0 0.0
    %493 = vmatprep.subr.mxu0 0.0
    %494 = vmatpush1.msra.mxu0 0.0
    %495 = vmatprep.subr.mxu0 0.0
    %496 = vmatpush1.msra.mxu0 0.0
    %497 = vmatprep.subr.mxu0 0.0
    %498 = vmatpush1.msra.mxu0 0.0
    %499 = vmatprep.subr.mxu0 0.0
    %500 = vmatpush1.msra.mxu0 0.0
    %501 = vmatprep.subr.mxu0 0.0
    %502 = vmatpush1.msra.mxu0 0.0
    %503 = vmatprep.subr.mxu0 0.0
    %504 = vmatpush1.msra.mxu0 0.0
    %505 = vmatprep.subr.mxu0 0.0
    %506 = vmatpush1.msra.mxu0 0.0
    %507 = vmatprep.subr.mxu0 0.0
    %508 = vmatpush1.msra.mxu0 0.0
    %509 = vmatprep.subr.mxu0 0.0
    %510 = vmatpush1.msra.mxu0 0.0
    %511 = vmatprep.subr.mxu0 0.0
    %512 = vmatpush1.msra.mxu0 0.0
    %513 = vmatprep.subr.mxu0 0.0
    %514 = vmatpush1.msra.mxu0 0.0
    %515 = vmatprep.subr.mxu0 0.0
    %516 = vmatpush1.msra.mxu0 0.0
    %517 = vmatprep.subr.mxu0 0.0
    %518 = vmatpush1.msra.mxu0 0.0
    %519 = vmatprep.subr.mxu0 0.0
    %520 = vmatpush1.msra.mxu0 0.0
    %521 = vmatprep.subr.mxu0 0.0
    %522 = vmatpush1.msra.mxu0 0.0
    %523 = vmatprep.subr.mxu0 0.0
    %524 = vmatpush1.msra.mxu0 0.0
    %525 = vmatprep.subr.mxu0 0.0
    %526 = vmatpush1.msra.mxu0 0.0
    %527 = vmatprep.subr.mxu0 0.0
    %528 = vmatpush1.msra.mxu0 0.0
    %529 = vmatprep.subr.mxu0 0.0
    %530 = vmatpush1.msra.mxu0 0.0
    %531 = vmatprep.subr.mxu0 0.0
    %532 = vmatpush1.msra.mxu0 0.0
    %533 = vmatprep.subr.mxu0 0.0
    %534 = vmatpush1.msra.mxu0 0.0
    %535 = vmatprep.subr.mxu0 0.0
    %536 = vmatpush1.msra.mxu0 0.0
    %537 = vmatprep.mubr.f32.mxu0 0.0
    %538 = vmatmul.mubr.f32.gmra.mrb[0].mxu0 %v471
    %v539 = vpop.f32.mrb[0].mxu0
    %v540 = vadd.f32 %v466, %v539
    %v541 = vpop.f32.mrb[0].mxu0
    %542 = vdwg.mxu0
    %543 = vst [vmem:[#allocation5] sm:$0xff] %v540
    %545 = vrot.lane.b32.xlu0 %v451, 32
    %v546 = vpop.permute.xlu0 %545
    %v547 = vsel %vm214, %v546, 0
    %549 = vmatprep.subr.mxu0 0.0
    %550 = vmatpush1.msra.mxu0 %v344
    %551 = vmatprep.subr.mxu0 0.0
    %552 = vmatpush1.msra.mxu0 %v345
    %553 = vmatprep.subr.mxu0 0.0
    %554 = vmatpush1.msra.mxu0 %v346
    %555 = vmatprep.subr.mxu0 0.0
    %556 = vmatpush1.msra.mxu0 %v347
    %557 = vmatprep.subr.mxu0 0.0
    %558 = vmatpush1.msra.mxu0 0.0
    %559 = vmatprep.subr.mxu0 0.0
    %560 = vmatpush1.msra.mxu0 0.0
    %561 = vmatprep.subr.mxu0 0.0
    %562 = vmatpush1.msra.mxu0 0.0
    %563 = vmatprep.subr.mxu0 0.0
    %564 = vmatpush1.msra.mxu0 0.0
    %565 = vmatprep.subr.mxu0 0.0
    %566 = vmatpush1.msra.mxu0 0.0
    %567 = vmatprep.subr.mxu0 0.0
    %568 = vmatpush1.msra.mxu0 0.0
    %569 = vmatprep.subr.mxu0 0.0
    %570 = vmatpush1.msra.mxu0 0.0
    %571 = vmatprep.subr.mxu0 0.0
    %572 = vmatpush1.msra.mxu0 0.0
    %573 = vmatprep.subr.mxu0 0.0
    %574 = vmatpush1.msra.mxu0 0.0
    %575 = vmatprep.subr.mxu0 0.0
    %576 = vmatpush1.msra.mxu0 0.0
    %577 = vmatprep.subr.mxu0 0.0
    %578 = vmatpush1.msra.mxu0 0.0
    %579 = vmatprep.subr.mxu0 0.0
    %580 = vmatpush1.msra.mxu0 0.0
    %581 = vmatprep.subr.mxu0 0.0
    %582 = vmatpush1.msra.mxu0 0.0
    %583 = vmatprep.subr.mxu0 0.0
    %584 = vmatpush1.msra.mxu0 0.0
    %585 = vmatprep.subr.mxu0 0.0
    %586 = vmatpush1.msra.mxu0 0.0
    %587 = vmatprep.subr.mxu0 0.0
    %588 = vmatpush1.msra.mxu0 0.0
    %589 = vmatprep.subr.mxu0 0.0
    %590 = vmatpush1.msra.mxu0 0.0
    %591 = vmatprep.subr.mxu0 0.0
    %592 = vmatpush1.msra.mxu0 0.0
    %593 = vmatprep.subr.mxu0 0.0
    %594 = vmatpush1.msra.mxu0 0.0
    %595 = vmatprep.subr.mxu0 0.0
    %596 = vmatpush1.msra.mxu0 0.0
    %597 = vmatprep.subr.mxu0 0.0
    %598 = vmatpush1.msra.mxu0 0.0
    %599 = vmatprep.subr.mxu0 0.0
    %600 = vmatpush1.msra.mxu0 0.0
    %601 = vmatprep.subr.mxu0 0.0
    %602 = vmatpush1.msra.mxu0 0.0
    %603 = vmatprep.subr.mxu0 0.0
    %604 = vmatpush1.msra.mxu0 0.0
    %605 = vmatprep.subr.mxu0 0.0
    %606 = vmatpush1.msra.mxu0 0.0
    %607 = vmatprep.subr.mxu0 0.0
    %608 = vmatpush1.msra.mxu0 0.0
    %609 = vmatprep.subr.mxu0 0.0
    %610 = vmatpush1.msra.mxu0 0.0
    %611 = vmatprep.subr.mxu0 0.0
    %612 = vmatpush1.msra.mxu0 0.0
    %613 = vmatprep.mubr.f32.mxu0 0.0
    %614 = vmatmul.mubr.f32.gmra.mrb[0].mxu0 %v547
    %v615 = vpop.f32.mrb[0].mxu0
    %v616 = vadd.f32 0.0, %v615
    %v617 = vpop.f32.mrb[0].mxu0
    %618 = vdwg.mxu0
    %v619 = vadd.f32 %v311, %v616
    %v620 = vxor.u32 %v619, 2147483648
    %v621 = vmul.f32 %v620, 1.442695
    %v622 = vpow.pop %v621
    %v623 = vadd.f32 %v622, 1.0
    %v624 = vrcp.pop %v623
    %v625 = vmul.f32 1.0, %v624
    %v626 = vtanh.pop %v619
    %v627 = vmul.f32 %v625, %v445
    %629 = vrot.lane.b32.xlu0 %v626, 64
    %v630 = vpop.permute.xlu0 %629
    %v632 = vmul.f32 %v625, %v630
    %634 = vrot.lane.b32.xlu0 %v632, 32
    %v635 = vpop.permute.xlu0 %634
    %v637 = vadd.f32 %v627, %v635
    %v638 = vtanh.pop %v637
    %640 = vrot.lane.b32.xlu0 %v638, 64
    %v641 = vpop.permute.xlu0 %640
    %v643 = vmul.f32 %v625, %v641
    %vm644 = vcmp.gt.s32.totalorder %v353, 1
    %v645 = vsel %vm644, 1, 0
    %v646 = vcvt.s32.f32 %v645
    %v647 = vmax.f32 %v643, 0.0
    %649 = vset.pattern.permute.xlu0 0
    %650 = vperm.xlu0 %649, %v646
    %v651 = vpop.permute.xlu0 %650
    %v653 = vmul.f32 %v651, %v647
    %655 = vrot.lane.b32.xlu0 %v653, 32
    %v656 = vpop.permute.xlu0 %655
    %v657 = vsel %vm214, %v656, 0
    %659 = vmatprep.subr.mxu0 0.0
    %660 = vmatpush1.msra.mxu0 %v348
    %661 = vmatprep.subr.mxu0 0.0
    %662 = vmatpush1.msra.mxu0 %v349
    %663 = vmatprep.subr.mxu0 0.0
    %664 = vmatpush1.msra.mxu0 %v350
    %665 = vmatprep.subr.mxu0 0.0
    %666 = vmatpush1.msra.mxu0 %v351
    %667 = vmatprep.subr.mxu0 0.0
    %668 = vmatpush1.msra.mxu0 0.0
    %669 = vmatprep.subr.mxu0 0.0
    %670 = vmatpush1.msra.mxu0 0.0
    %671 = vmatprep.subr.mxu0 0.0
    %672 = vmatpush1.msra.mxu0 0.0
    %673 = vmatprep.subr.mxu0 0.0
    %674 = vmatpush1.msra.mxu0 0.0
    %675 = vmatprep.subr.mxu0 0.0
    %676 = vmatpush1.msra.mxu0 0.0
    %677 = vmatprep.subr.mxu0 0.0
    %678 = vmatpush1.msra.mxu0 0.0
    %679 = vmatprep.subr.mxu0 0.0
    %680 = vmatpush1.msra.mxu0 0.0
    %681 = vmatprep.subr.mxu0 0.0
    %682 = vmatpush1.msra.mxu0 0.0
    %683 = vmatprep.subr.mxu0 0.0
    %684 = vmatpush1.msra.mxu0 0.0
    %685 = vmatprep.subr.mxu0 0.0
    %686 = vmatpush1.msra.mxu0 0.0
    %687 = vmatprep.subr.mxu0 0.0
    %688 = vmatpush1.msra.mxu0 0.0
    %689 = vmatprep.subr.mxu0 0.0
    %690 = vmatpush1.msra.mxu0 0.0
    %691 = vmatprep.subr.mxu0 0.0
    %692 = vmatpush1.msra.mxu0 0.0
    %693 = vmatprep.subr.mxu0 0.0
    %694 = vmatpush1.msra.mxu0 0.0
    %695 = vmatprep.subr.mxu0 0.0
    %696 = vmatpush1.msra.mxu0 0.0
    %697 = vmatprep.subr.mxu0 0.0
    %698 = vmatpush1.msra.mxu0 0.0
    %699 = vmatprep.subr.mxu0 0.0
    %700 = vmatpush1.msra.mxu0 0.0
    %701 = vmatprep.subr.mxu0 0.0
    %702 = vmatpush1.msra.mxu0 0.0
    %703 = vmatprep.subr.mxu0 0.0
    %704 = vmatpush1.msra.mxu0 0.0
    %705 = vmatprep.subr.mxu0 0.0
    %706 = vmatpush1.msra.mxu0 0.0
    %707 = vmatprep.subr.mxu0 0.0
    %708 = vmatpush1.msra.mxu0 0.0
    %709 = vmatprep.subr.mxu0 0.0
    %710 = vmatpush1.msra.mxu0 0.0
    %711 = vmatprep.subr.mxu0 0.0
    %712 = vmatpush1.msra.mxu0 0.0
    %713 = vmatprep.subr.mxu0 0.0
    %714 = vmatpush1.msra.mxu0 0.0
    %715 = vmatprep.subr.mxu0 0.0
    %716 = vmatpush1.msra.mxu0 0.0
    %717 = vmatprep.subr.mxu0 0.0
    %718 = vmatpush1.msra.mxu0 0.0
    %719 = vmatprep.subr.mxu0 0.0
    %720 = vmatpush1.msra.mxu0 0.0
    %721 = vmatprep.subr.mxu0 0.0
    %722 = vmatpush1.msra.mxu0 0.0
    %723 = vmatprep.mubr.f32.mxu0 0.0
    %724 = vmatmul.mubr.f32.gmra.mrb[0].mxu0 %v657
    %v725 = vpop.f32.mrb[0].mxu0
    %v726 = vadd.f32 %v466, %v725
    %v727 = vpop.f32.mrb[0].mxu0
    %728 = vdwg.mxu0
    %729 = vst [vmem:[#allocation5 + $0x8] sm:$0xff] %v726
    %731 = vrot.lane.b32.xlu0 %v643, 32
    %v732 = vpop.permute.xlu0 %731
    %v733 = vsel %vm214, %v732, 0
    %735 = vmatprep.subr.mxu0 0.0
    %736 = vmatpush1.msra.mxu0 %v344
    %737 = vmatprep.subr.mxu0 0.0
    %738 = vmatpush1.msra.mxu0 %v345
    %739 = vmatprep.subr.mxu0 0.0
    %740 = vmatpush1.msra.mxu0 %v346
    %741 = vmatprep.subr.mxu0 0.0
    %742 = vmatpush1.msra.mxu0 %v347
    %743 = vmatprep.subr.mxu0 0.0
    %744 = vmatpush1.msra.mxu0 0.0
    %745 = vmatprep.subr.mxu0 0.0
    %746 = vmatpush1.msra.mxu0 0.0
    %747 = vmatprep.subr.mxu0 0.0
    %748 = vmatpush1.msra.mxu0 0.0
    %749 = vmatprep.subr.mxu0 0.0
    %750 = vmatpush1.msra.mxu0 0.0
    %751 = vmatprep.subr.mxu0 0.0
    %752 = vmatpush1.msra.mxu0 0.0
    %753 = vmatprep.subr.mxu0 0.0
    %754 = vmatpush1.msra.mxu0 0.0
    %755 = vmatprep.subr.mxu0 0.0
    %756 = vmatpush1.msra.mxu0 0.0
    %757 = vmatprep.subr.mxu0 0.0
    %758 = vmatpush1.msra.mxu0 0.0
    %759 = vmatprep.subr.mxu0 0.0
    %760 = vmatpush1.msra.mxu0 0.0
    %761 = vmatprep.subr.mxu0 0.0
    %762 = vmatpush1.msra.mxu0 0.0
    %763 = vmatprep.subr.mxu0 0.0
    %764 = vmatpush1.msra.mxu0 0.0
    %765 = vmatprep.subr.mxu0 0.0
    %766 = vmatpush1.msra.mxu0 0.0
    %767 = vmatprep.subr.mxu0 0.0
    %768 = vmatpush1.msra.mxu0 0.0
    %769 = vmatprep.subr.mxu0 0.0
    %770 = vmatpush1.msra.mxu0 0.0
    %771 = vmatprep.subr.mxu0 0.0
    %772 = vmatpush1.msra.mxu0 0.0
    %773 = vmatprep.subr.mxu0 0.0
    %774 = vmatpush1.msra.mxu0 0.0
    %775 = vmatprep.subr.mxu0 0.0
    %776 = vmatpush1.msra.mxu0 0.0
    %777 = vmatprep.subr.mxu0 0.0
    %778 = vmatpush1.msra.mxu0 0.0
    %779 = vmatprep.subr.mxu0 0.0
    %780 = vmatpush1.msra.mxu0 0.0
    %781 = vmatprep.subr.mxu0 0.0
    %782 = vmatpush1.msra.mxu0 0.0
    %783 = vmatprep.subr.mxu0 0.0
    %784 = vmatpush1.msra.mxu0 0.0
    %785 = vmatprep.subr.mxu0 0.0
    %786 = vmatpush1.msra.mxu0 0.0
    %787 = vmatprep.subr.mxu0 0.0
    %788 = vmatpush1.msra.mxu0 0.0
    %789 = vmatprep.subr.mxu0 0.0
    %790 = vmatpush1.msra.mxu0 0.0
    %791 = vmatprep.subr.mxu0 0.0
    %792 = vmatpush1.msra.mxu0 0.0
    %793 = vmatprep.subr.mxu0 0.0
    %794 = vmatpush1.msra.mxu0 0.0
    %795 = vmatprep.subr.mxu0 0.0
    %796 = vmatpush1.msra.mxu0 0.0
    %797 = vmatprep.subr.mxu0 0.0
    %798 = vmatpush1.msra.mxu0 0.0
    %799 = vmatprep.mubr.f32.mxu0 0.0
    %800 = vmatmul.mubr.f32.gmra.mrb[0].mxu0 %v733
    %v801 = vpop.f32.mrb[0].mxu0
    %v802 = vadd.f32 0.0, %v801
    %v803 = vpop.f32.mrb[0].mxu0
    %804 = vdwg.mxu0
    %v805 = vadd.f32 %v316, %v802
    %v806 = vxor.u32 %v805, 2147483648
    %v807 = vmul.f32 %v806, 1.442695
    %v808 = vpow.pop %v807
    %v809 = vadd.f32 %v808, 1.0
    %v810 = vrcp.pop %v809
    %v811 = vmul.f32 1.0, %v810
    %v812 = vtanh.pop %v805
    %v813 = vmul.f32 %v811, %v637
    %815 = vrot.lane.b32.xlu0 %v812, 64
    %v816 = vpop.permute.xlu0 %815
    %v818 = vmul.f32 %v811, %v816
    %820 = vrot.lane.b32.xlu0 %v818, 32
    %v821 = vpop.permute.xlu0 %820
    %v823 = vadd.f32 %v813, %v821
    %v824 = vtanh.pop %v823
    %826 = vrot.lane.b32.xlu0 %v824, 64
    %v827 = vpop.permute.xlu0 %826
    %v829 = vmul.f32 %v811, %v827
    %vm830 = vcmp.gt.s32.totalorder %v353, 2
    %v831 = vsel %vm830, 1, 0
    %v832 = vcvt.s32.f32 %v831
    %v833 = vmax.f32 %v829, 0.0
    %835 = vset.pattern.permute.xlu0 0
    %836 = vperm.xlu0 %835, %v832
    %v837 = vpop.permute.xlu0 %836
    %v839 = vmul.f32 %v837, %v833
    %841 = vrot.lane.b32.xlu0 %v839, 32
    %v842 = vpop.permute.xlu0 %841
    %v843 = vsel %vm214, %v842, 0
    %845 = vmatprep.subr.mxu0 0.0
    %846 = vmatpush1.msra.mxu0 %v348
    %847 = vmatprep.subr.mxu0 0.0
    %848 = vmatpush1.msra.mxu0 %v349
    %849 = vmatprep.subr.mxu0 0.0
    %850 = vmatpush1.msra.mxu0 %v350
    %851 = vmatprep.subr.mxu0 0.0
    %852 = vmatpush1.msra.mxu0 %v351
    %853 = vmatprep.subr.mxu0 0.0
    %854 = vmatpush1.msra.mxu0 0.0
    %855 = vmatprep.subr.mxu0 0.0
    %856 = vmatpush1.msra.mxu0 0.0
    %857 = vmatprep.subr.mxu0 0.0
    %858 = vmatpush1.msra.mxu0 0.0
    %859 = vmatprep.subr.mxu0 0.0
    %860 = vmatpush1.msra.mxu0 0.0
    %861 = vmatprep.subr.mxu0 0.0
    %862 = vmatpush1.msra.mxu0 0.0
    %863 = vmatprep.subr.mxu0 0.0
    %864 = vmatpush1.msra.mxu0 0.0
    %865 = vmatprep.subr.mxu0 0.0
    %866 = vmatpush1.msra.mxu0 0.0
    %867 = vmatprep.subr.mxu0 0.0
    %868 = vmatpush1.msra.mxu0 0.0
    %869 = vmatprep.subr.mxu0 0.0
    %870 = vmatpush1.msra.mxu0 0.0
    %871 = vmatprep.subr.mxu0 0.0
    %872 = vmatpush1.msra.mxu0 0.0
    %873 = vmatprep.subr.mxu0 0.0
    %874 = vmatpush1.msra.mxu0 0.0
    %875 = vmatprep.subr.mxu0 0.0
    %876 = vmatpush1.msra.mxu0 0.0
    %877 = vmatprep.subr.mxu0 0.0
    %878 = vmatpush1.msra.mxu0 0.0
    %879 = vmatprep.subr.mxu0 0.0
    %880 = vmatpush1.msra.mxu0 0.0
    %881 = vmatprep.subr.mxu0 0.0
    %882 = vmatpush1.msra.mxu0 0.0
    %883 = vmatprep.subr.mxu0 0.0
    %884 = vmatpush1.msra.mxu0 0.0
    %885 = vmatprep.subr.mxu0 0.0
    %886 = vmatpush1.msra.mxu0 0.0
    %887 = vmatprep.subr.mxu0 0.0
    %888 = vmatpush1.msra.mxu0 0.0
    %889 = vmatprep.subr.mxu0 0.0
    %890 = vmatpush1.msra.mxu0 0.0
    %891 = vmatprep.subr.mxu0 0.0
    %892 = vmatpush1.msra.mxu0 0.0
    %893 = vmatprep.subr.mxu0 0.0
    %894 = vmatpush1.msra.mxu0 0.0
    %895 = vmatprep.subr.mxu0 0.0
    %896 = vmatpush1.msra.mxu0 0.0
    %897 = vmatprep.subr.mxu0 0.0
    %898 = vmatpush1.msra.mxu0 0.0
    %899 = vmatprep.subr.mxu0 0.0
    %900 = vmatpush1.msra.mxu0 0.0
    %901 = vmatprep.subr.mxu0 0.0
    %902 = vmatpush1.msra.mxu0 0.0
    %903 = vmatprep.subr.mxu0 0.0
    %904 = vmatpush1.msra.mxu0 0.0
    %905 = vmatprep.subr.mxu0 0.0
    %906 = vmatpush1.msra.mxu0 0.0
    %907 = vmatprep.subr.mxu0 0.0
    %908 = vmatpush1.msra.mxu0 0.0
    %909 = vmatprep.mubr.f32.mxu0 0.0
    %910 = vmatmul.mubr.f32.gmra.mrb[0].mxu0 %v843
    %v911 = vpop.f32.mrb[0].mxu0
    %v912 = vadd.f32 %v466, %v911
    %v913 = vpop.f32.mrb[0].mxu0
    %914 = vdwg.mxu0
    %915 = vst [vmem:[#allocation5 + $0x10] sm:$0xff] %v912
    %917 = vrot.lane.b32.xlu0 %v829, 32
    %v918 = vpop.permute.xlu0 %917
    %v919 = vsel %vm214, %v918, 0
    %921 = vmatprep.subr.mxu0 0.0
    %922 = vmatpush1.msra.mxu0 %v344
    %923 = vmatprep.subr.mxu0 0.0
    %924 = vmatpush1.msra.mxu0 %v345
    %925 = vmatprep.subr.mxu0 0.0
    %926 = vmatpush1.msra.mxu0 %v346
    %927 = vmatprep.subr.mxu0 0.0
    %928 = vmatpush1.msra.mxu0 %v347
    %929 = vmatprep.subr.mxu0 0.0
    %930 = vmatpush1.msra.mxu0 0.0
    %931 = vmatprep.subr.mxu0 0.0
    %932 = vmatpush1.msra.mxu0 0.0
    %933 = vmatprep.subr.mxu0 0.0
    %934 = vmatpush1.msra.mxu0 0.0
    %935 = vmatprep.subr.mxu0 0.0
    %936 = vmatpush1.msra.mxu0 0.0
    %937 = vmatprep.subr.mxu0 0.0
    %938 = vmatpush1.msra.mxu0 0.0
    %939 = vmatprep.subr.mxu0 0.0
    %940 = vmatpush1.msra.mxu0 0.0
    %941 = vmatprep.subr.mxu0 0.0
    %942 = vmatpush1.msra.mxu0 0.0
    %943 = vmatprep.subr.mxu0 0.0
    %944 = vmatpush1.msra.mxu0 0.0
    %945 = vmatprep.subr.mxu0 0.0
    %946 = vmatpush1.msra.mxu0 0.0
    %947 = vmatprep.subr.mxu0 0.0
    %948 = vmatpush1.msra.mxu0 0.0
    %949 = vmatprep.subr.mxu0 0.0
    %950 = vmatpush1.msra.mxu0 0.0
    %951 = vmatprep.subr.mxu0 0.0
    %952 = vmatpush1.msra.mxu0 0.0
    %953 = vmatprep.subr.mxu0 0.0
    %954 = vmatpush1.msra.mxu0 0.0
    %955 = vmatprep.subr.mxu0 0.0
    %956 = vmatpush1.msra.mxu0 0.0
    %957 = vmatprep.subr.mxu0 0.0
    %958 = vmatpush1.msra.mxu0 0.0
    %959 = vmatprep.subr.mxu0 0.0
    %960 = vmatpush1.msra.mxu0 0.0
    %961 = vmatprep.subr.mxu0 0.0
    %962 = vmatpush1.msra.mxu0 0.0
    %963 = vmatprep.subr.mxu0 0.0
    %964 = vmatpush1.msra.mxu0 0.0
    %965 = vmatprep.subr.mxu0 0.0
    %966 = vmatpush1.msra.mxu0 0.0
    %967 = vmatprep.subr.mxu0 0.0
    %968 = vmatpush1.msra.mxu0 0.0
    %969 = vmatprep.subr.mxu0 0.0
    %970 = vmatpush1.msra.mxu0 0.0
    %971 = vmatprep.subr.mxu0 0.0
    %972 = vmatpush1.msra.mxu0 0.0
    %973 = vmatprep.subr.mxu0 0.0
    %974 = vmatpush1.msra.mxu0 0.0
    %975 = vmatprep.subr.mxu0 0.0
    %976 = vmatpush1.msra.mxu0 0.0
    %977 = vmatprep.subr.mxu0 0.0
    %978 = vmatpush1.msra.mxu0 0.0
    %979 = vmatprep.subr.mxu0 0.0
    %980 = vmatpush1.msra.mxu0 0.0
    %981 = vmatprep.subr.mxu0 0.0
    %982 = vmatpush1.msra.mxu0 0.0
    %983 = vmatprep.subr.mxu0 0.0
    %984 = vmatpush1.msra.mxu0 0.0
    %985 = vmatprep.mubr.f32.mxu0 0.0
    %986 = vmatmul.mubr.f32.gmra.mrb[0].mxu0 %v919
    %v987 = vpop.f32.mrb[0].mxu0
    %v988 = vadd.f32 0.0, %v987
    %v989 = vpop.f32.mrb[0].mxu0
    %990 = vdwg.mxu0
    %v991 = vadd.f32 %v321, %v988
    %v992 = vxor.u32 %v991, 2147483648
    %v993 = vmul.f32 %v992, 1.442695
    %v994 = vpow.pop %v993
    %v995 = vadd.f32 %v994, 1.0
    %v996 = vrcp.pop %v995
    %v997 = vmul.f32 1.0, %v996
    %v998 = vtanh.pop %v991
    %v999 = vmul.f32 %v997, %v823
    %1001 = vrot.lane.b32.xlu0 %v998, 64
    %v1002 = vpop.permute.xlu0 %1001
    %v1004 = vmul.f32 %v997, %v1002
    %1006 = vrot.lane.b32.xlu0 %v1004, 32
    %v1007 = vpop.permute.xlu0 %1006
    %v1009 = vadd.f32 %v999, %v1007
    %v1010 = vtanh.pop %v1009
    %1012 = vrot.lane.b32.xlu0 %v1010, 64
    %v1013 = vpop.permute.xlu0 %1012
    %v1015 = vmul.f32 %v997, %v1013
    %vm1016 = vcmp.gt.s32.totalorder %v353, 3
    %v1017 = vsel %vm1016, 1, 0
    %v1018 = vcvt.s32.f32 %v1017
    %v1019 = vmax.f32 %v1015, 0.0
    %1021 = vset.pattern.permute.xlu0 0
    %1022 = vperm.xlu0 %1021, %v1018
    %v1023 = vpop.permute.xlu0 %1022
    %v1025 = vmul.f32 %v1023, %v1019
    %1027 = vrot.lane.b32.xlu0 %v1025, 32
    %v1028 = vpop.permute.xlu0 %1027
    %v1029 = vsel %vm214, %v1028, 0
    %1031 = vmatprep.subr.mxu0 0.0
    %1032 = vmatpush1.msra.mxu0 %v348
    %1033 = vmatprep.subr.mxu0 0.0
    %1034 = vmatpush1.msra.mxu0 %v349
    %1035 = vmatprep.subr.mxu0 0.0
    %1036 = vmatpush1.msra.mxu0 %v350
    %1037 = vmatprep.subr.mxu0 0.0
    %1038 = vmatpush1.msra.mxu0 %v351
    %1039 = vmatprep.subr.mxu0 0.0
    %1040 = vmatpush1.msra.mxu0 0.0
    %1041 = vmatprep.subr.mxu0 0.0
    %1042 = vmatpush1.msra.mxu0 0.0
    %1043 = vmatprep.subr.mxu0 0.0
    %1044 = vmatpush1.msra.mxu0 0.0
    %1045 = vmatprep.subr.mxu0 0.0
    %1046 = vmatpush1.msra.mxu0 0.0
    %1047 = vmatprep.subr.mxu0 0.0
    %1048 = vmatpush1.msra.mxu0 0.0
    %1049 = vmatprep.subr.mxu0 0.0
    %1050 = vmatpush1.msra.mxu0 0.0
    %1051 = vmatprep.subr.mxu0 0.0
    %1052 = vmatpush1.msra.mxu0 0.0
    %1053 = vmatprep.subr.mxu0 0.0
    %1054 = vmatpush1.msra.mxu0 0.0
    %1055 = vmatprep.subr.mxu0 0.0
    %1056 = vmatpush1.msra.mxu0 0.0
    %1057 = vmatprep.subr.mxu0 0.0
    %1058 = vmatpush1.msra.mxu0 0.0
    %1059 = vmatprep.subr.mxu0 0.0
    %1060 = vmatpush1.msra.mxu0 0.0
    %1061 = vmatprep.subr.mxu0 0.0
    %1062 = vmatpush1.msra.mxu0 0.0
    %1063 = vmatprep.subr.mxu0 0.0
    %1064 = vmatpush1.msra.mxu0 0.0
    %1065 = vmatprep.subr.mxu0 0.0
    %1066 = vmatpush1.msra.mxu0 0.0
    %1067 = vmatprep.subr.mxu0 0.0
    %1068 = vmatpush1.msra.mxu0 0.0
    %1069 = vmatprep.subr.mxu0 0.0
    %1070 = vmatpush1.msra.mxu0 0.0
    %1071 = vmatprep.subr.mxu0 0.0
    %1072 = vmatpush1.msra.mxu0 0.0
    %1073 = vmatprep.subr.mxu0 0.0
    %1074 = vmatpush1.msra.mxu0 0.0
    %1075 = vmatprep.subr.mxu0 0.0
    %1076 = vmatpush1.msra.mxu0 0.0
    %1077 = vmatprep.subr.mxu0 0.0
    %1078 = vmatpush1.msra.mxu0 0.0
    %1079 = vmatprep.subr.mxu0 0.0
    %1080 = vmatpush1.msra.mxu0 0.0
    %1081 = vmatprep.subr.mxu0 0.0
    %1082 = vmatpush1.msra.mxu0 0.0
    %1083 = vmatprep.subr.mxu0 0.0
    %1084 = vmatpush1.msra.mxu0 0.0
    %1085 = vmatprep.subr.mxu0 0.0
    %1086 = vmatpush1.msra.mxu0 0.0
    %1087 = vmatprep.subr.mxu0 0.0
    %1088 = vmatpush1.msra.mxu0 0.0
    %1089 = vmatprep.subr.mxu0 0.0
    %1090 = vmatpush1.msra.mxu0 0.0
    %1091 = vmatprep.subr.mxu0 0.0
    %1092 = vmatpush1.msra.mxu0 0.0
    %1093 = vmatprep.subr.mxu0 0.0
    %1094 = vmatpush1.msra.mxu0 0.0
    %1095 = vmatprep.mubr.f32.mxu0 0.0
    %1096 = vmatmul.mubr.f32.gmra.mrb[0].mxu0 %v1029
    %v1097 = vpop.f32.mrb[0].mxu0
    %v1098 = vadd.f32 %v466, %v1097
    %v1099 = vpop.f32.mrb[0].mxu0
    %1100 = vdwg.mxu0
    %1101 = vst [vmem:[#allocation5 + $0x18] sm:$0xff] %v1098
    %1103 = vrot.lane.b32.xlu0 %v1015, 32
    %v1104 = vpop.permute.xlu0 %1103
    %v1105 = vsel %vm214, %v1104, 0
    %1107 = vmatprep.subr.mxu0 0.0
    %1108 = vmatpush1.msra.mxu0 %v344
    %1109 = vmatprep.subr.mxu0 0.0
    %1110 = vmatpush1.msra.mxu0 %v345
    %1111 = vmatprep.subr.mxu0 0.0
    %1112 = vmatpush1.msra.mxu0 %v346
    %1113 = vmatprep.subr.mxu0 0.0
    %1114 = vmatpush1.msra.mxu0 %v347
    %1115 = vmatprep.subr.mxu0 0.0
    %1116 = vmatpush1.msra.mxu0 0.0
    %1117 = vmatprep.subr.mxu0 0.0
    %1118 = vmatpush1.msra.mxu0 0.0
    %1119 = vmatprep.subr.mxu0 0.0
    %1120 = vmatpush1.msra.mxu0 0.0
    %1121 = vmatprep.subr.mxu0 0.0
    %1122 = vmatpush1.msra.mxu0 0.0
    %1123 = vmatprep.subr.mxu0 0.0
    %1124 = vmatpush1.msra.mxu0 0.0
    %1125 = vmatprep.subr.mxu0 0.0
    %1126 = vmatpush1.msra.mxu0 0.0
    %1127 = vmatprep.subr.mxu0 0.0
    %1128 = vmatpush1.msra.mxu0 0.0
    %1129 = vmatprep.subr.mxu0 0.0
    %1130 = vmatpush1.msra.mxu0 0.0
    %1131 = vmatprep.subr.mxu0 0.0
    %1132 = vmatpush1.msra.mxu0 0.0
    %1133 = vmatprep.subr.mxu0 0.0
    %1134 = vmatpush1.msra.mxu0 0.0
    %1135 = vmatprep.subr.mxu0 0.0
    %1136 = vmatpush1.msra.mxu0 0.0
    %1137 = vmatprep.subr.mxu0 0.0
    %1138 = vmatpush1.msra.mxu0 0.0
    %1139 = vmatprep.subr.mxu0 0.0
    %1140 = vmatpush1.msra.mxu0 0.0
    %1141 = vmatprep.subr.mxu0 0.0
    %1142 = vmatpush1.msra.mxu0 0.0
    %1143 = vmatprep.subr.mxu0 0.0
    %1144 = vmatpush1.msra.mxu0 0.0
    %1145 = vmatprep.subr.mxu0 0.0
    %1146 = vmatpush1.msra.mxu0 0.0
    %1147 = vmatprep.subr.mxu0 0.0
    %1148 = vmatpush1.msra.mxu0 0.0
    %1149 = vmatprep.subr.mxu0 0.0
    %1150 = vmatpush1.msra.mxu0 0.0
    %1151 = vmatprep.subr.mxu0 0.0
    %1152 = vmatpush1.msra.mxu0 0.0
    %1153 = vmatprep.subr.mxu0 0.0
    %1154 = vmatpush1.msra.mxu0 0.0
    %1155 = vmatprep.subr.mxu0 0.0
    %1156 = vmatpush1.msra.mxu0 0.0
    %1157 = vmatprep.subr.mxu0 0.0
    %1158 = vmatpush1.msra.mxu0 0.0
    %1159 = vmatprep.subr.mxu0 0.0
    %1160 = vmatpush1.msra.mxu0 0.0
    %1161 = vmatprep.subr.mxu0 0.0
    %1162 = vmatpush1.msra.mxu0 0.0
    %1163 = vmatprep.subr.mxu0 0.0
    %1164 = vmatpush1.msra.mxu0 0.0
    %1165 = vmatprep.subr.mxu0 0.0
    %1166 = vmatpush1.msra.mxu0 0.0
    %1167 = vmatprep.subr.mxu0 0.0
    %1168 = vmatpush1.msra.mxu0 0.0
    %1169 = vmatprep.subr.mxu0 0.0
    %1170 = vmatpush1.msra.mxu0 0.0
    %1171 = vmatprep.mubr.f32.mxu0 0.0
    %1172 = vmatmul.mubr.f32.gmra.mrb[0].mxu0 %v1105
    %v1173 = vpop.f32.mrb[0].mxu0
    %v1174 = vadd.f32 0.0, %v1173
    %v1175 = vpop.f32.mrb[0].mxu0
    %1176 = vdwg.mxu0
    %v1177 = vadd.f32 %v326, %v1174
    %v1178 = vxor.u32 %v1177, 2147483648
    %v1179 = vmul.f32 %v1178, 1.442695
    %v1180 = vpow.pop %v1179
    %v1181 = vadd.f32 %v1180, 1.0
    %v1182 = vrcp.pop %v1181
    %v1183 = vmul.f32 1.0, %v1182
    %v1184 = vtanh.pop %v1177
    %v1185 = vmul.f32 %v1183, %v1009
    %1187 = vrot.lane.b32.xlu0 %v1184, 64
    %v1188 = vpop.permute.xlu0 %1187
    %v1190 = vmul.f32 %v1183, %v1188
    %1192 = vrot.lane.b32.xlu0 %v1190, 32
    %v1193 = vpop.permute.xlu0 %1192
    %v1195 = vadd.f32 %v1185, %v1193
    %v1196 = vtanh.pop %v1195
    %1198 = vrot.lane.b32.xlu0 %v1196, 64
    %v1199 = vpop.permute.xlu0 %1198
    %v1201 = vmul.f32 %v1183, %v1199
    %vm1202 = vcmp.gt.s32.totalorder %v353, 4
    %v1203 = vsel %vm1202, 1, 0
    %v1204 = vcvt.s32.f32 %v1203
    %v1205 = vmax.f32 %v1201, 0.0
    %1207 = vset.pattern.permute.xlu0 0
    %1208 = vperm.xlu0 %1207, %v1204
    %v1209 = vpop.permute.xlu0 %1208
    %v1211 = vmul.f32 %v1209, %v1205
    %1213 = vrot.lane.b32.xlu0 %v1211, 32
    %v1214 = vpop.permute.xlu0 %1213
    %v1215 = vsel %vm214, %v1214, 0
    %1217 = vmatprep.subr.mxu0 0.0
    %1218 = vmatpush1.msra.mxu0 %v348
    %1219 = vmatprep.subr.mxu0 0.0
    %1220 = vmatpush1.msra.mxu0 %v349
    %1221 = vmatprep.subr.mxu0 0.0
    %1222 = vmatpush1.msra.mxu0 %v350
    %1223 = vmatprep.subr.mxu0 0.0
    %1224 = vmatpush1.msra.mxu0 %v351
    %1225 = vmatprep.subr.mxu0 0.0
    %1226 = vmatpush1.msra.mxu0 0.0
    %1227 = vmatprep.subr.mxu0 0.0
    %1228 = vmatpush1.msra.mxu0 0.0
    %1229 = vmatprep.subr.mxu0 0.0
    %1230 = vmatpush1.msra.mxu0 0.0
    %1231 = vmatprep.subr.mxu0 0.0
    %1232 = vmatpush1.msra.mxu0 0.0
    %1233 = vmatprep.subr.mxu0 0.0
    %1234 = vmatpush1.msra.mxu0 0.0
    %1235 = vmatprep.subr.mxu0 0.0
    %1236 = vmatpush1.msra.mxu0 0.0
    %1237 = vmatprep.subr.mxu0 0.0
    %1238 = vmatpush1.msra.mxu0 0.0
    %1239 = vmatprep.subr.mxu0 0.0
    %1240 = vmatpush1.msra.mxu0 0.0
    %1241 = vmatprep.subr.mxu0 0.0
    %1242 = vmatpush1.msra.mxu0 0.0
    %1243 = vmatprep.subr.mxu0 0.0
    %1244 = vmatpush1.msra.mxu0 0.0
    %1245 = vmatprep.subr.mxu0 0.0
    %1246 = vmatpush1.msra.mxu0 0.0
    %1247 = vmatprep.subr.mxu0 0.0
    %1248 = vmatpush1.msra.mxu0 0.0
    %1249 = vmatprep.subr.mxu0 0.0
    %1250 = vmatpush1.msra.mxu0 0.0
    %1251 = vmatprep.subr.mxu0 0.0
    %1252 = vmatpush1.msra.mxu0 0.0
    %1253 = vmatprep.subr.mxu0 0.0
    %1254 = vmatpush1.msra.mxu0 0.0
    %1255 = vmatprep.subr.mxu0 0.0
    %1256 = vmatpush1.msra.mxu0 0.0
    %1257 = vmatprep.subr.mxu0 0.0
    %1258 = vmatpush1.msra.mxu0 0.0
    %1259 = vmatprep.subr.mxu0 0.0
    %1260 = vmatpush1.msra.mxu0 0.0
    %1261 = vmatprep.subr.mxu0 0.0
    %1262 = vmatpush1.msra.mxu0 0.0
    %1263 = vmatprep.subr.mxu0 0.0
    %1264 = vmatpush1.msra.mxu0 0.0
    %1265 = vmatprep.subr.mxu0 0.0
    %1266 = vmatpush1.msra.mxu0 0.0
    %1267 = vmatprep.subr.mxu0 0.0
    %1268 = vmatpush1.msra.mxu0 0.0
    %1269 = vmatprep.subr.mxu0 0.0
    %1270 = vmatpush1.msra.mxu0 0.0
    %1271 = vmatprep.subr.mxu0 0.0
    %1272 = vmatpush1.msra.mxu0 0.0
    %1273 = vmatprep.subr.mxu0 0.0
    %1274 = vmatpush1.msra.mxu0 0.0
    %1275 = vmatprep.subr.mxu0 0.0
    %1276 = vmatpush1.msra.mxu0 0.0
    %1277 = vmatprep.subr.mxu0 0.0
    %1278 = vmatpush1.msra.mxu0 0.0
    %1279 = vmatprep.subr.mxu0 0.0
    %1280 = vmatpush1.msra.mxu0 0.0
    %1281 = vmatprep.mubr.f32.mxu0 0.0
    %1282 = vmatmul.mubr.f32.gmra.mrb[0].mxu0 %v1215
    %v1283 = vpop.f32.mrb[0].mxu0
    %v1284 = vadd.f32 %v466, %v1283
    %v1285 = vpop.f32.mrb[0].mxu0
    %1286 = vdwg.mxu0
    %1287 = vst [vmem:[#allocation5 + $0x20] sm:$0xff] %v1284
    %1289 = vrot.lane.b32.xlu0 %v1201, 32
    %v1290 = vpop.permute.xlu0 %1289
    %v1291 = vsel %vm214, %v1290, 0
    %1293 = vmatprep.subr.mxu0 0.0
    %1294 = vmatpush1.msra.mxu0 %v344
    %1295 = vmatprep.subr.mxu0 0.0
    %1296 = vmatpush1.msra.mxu0 %v345
    %1297 = vmatprep.subr.mxu0 0.0
    %1298 = vmatpush1.msra.mxu0 %v346
    %1299 = vmatprep.subr.mxu0 0.0
    %1300 = vmatpush1.msra.mxu0 %v347
    %1301 = vmatprep.subr.mxu0 0.0
    %1302 = vmatpush1.msra.mxu0 0.0
    %1303 = vmatprep.subr.mxu0 0.0
    %1304 = vmatpush1.msra.mxu0 0.0
    %1305 = vmatprep.subr.mxu0 0.0
    %1306 = vmatpush1.msra.mxu0 0.0
    %1307 = vmatprep.subr.mxu0 0.0
    %1308 = vmatpush1.msra.mxu0 0.0
    %1309 = vmatprep.subr.mxu0 0.0
    %1310 = vmatpush1.msra.mxu0 0.0
    %1311 = vmatprep.subr.mxu0 0.0
    %1312 = vmatpush1.msra.mxu0 0.0
    %1313 = vmatprep.subr.mxu0 0.0
    %1314 = vmatpush1.msra.mxu0 0.0
    %1315 = vmatprep.subr.mxu0 0.0
    %1316 = vmatpush1.msra.mxu0 0.0
    %1317 = vmatprep.subr.mxu0 0.0
    %1318 = vmatpush1.msra.mxu0 0.0
    %1319 = vmatprep.subr.mxu0 0.0
    %1320 = vmatpush1.msra.mxu0 0.0
    %1321 = vmatprep.subr.mxu0 0.0
    %1322 = vmatpush1.msra.mxu0 0.0
    %1323 = vmatprep.subr.mxu0 0.0
    %1324 = vmatpush1.msra.mxu0 0.0
    %1325 = vmatprep.subr.mxu0 0.0
    %1326 = vmatpush1.msra.mxu0 0.0
    %1327 = vmatprep.subr.mxu0 0.0
    %1328 = vmatpush1.msra.mxu0 0.0
    %1329 = vmatprep.subr.mxu0 0.0
    %1330 = vmatpush1.msra.mxu0 0.0
    %1331 = vmatprep.subr.mxu0 0.0
    %1332 = vmatpush1.msra.mxu0 0.0
    %1333 = vmatprep.subr.mxu0 0.0
    %1334 = vmatpush1.msra.mxu0 0.0
    %1335 = vmatprep.subr.mxu0 0.0
    %1336 = vmatpush1.msra.mxu0 0.0
    %1337 = vmatprep.subr.mxu0 0.0
    %1338 = vmatpush1.msra.mxu0 0.0
    %1339 = vmatprep.subr.mxu0 0.0
    %1340 = vmatpush1.msra.mxu0 0.0
    %1341 = vmatprep.subr.mxu0 0.0
    %1342 = vmatpush1.msra.mxu0 0.0
    %1343 = vmatprep.subr.mxu0 0.0
    %1344 = vmatpush1.msra.mxu0 0.0
    %1345 = vmatprep.subr.mxu0 0.0
    %1346 = vmatpush1.msra.mxu0 0.0
    %1347 = vmatprep.subr.mxu0 0.0
    %1348 = vmatpush1.msra.mxu0 0.0
    %1349 = vmatprep.subr.mxu0 0.0
    %1350 = vmatpush1.msra.mxu0 0.0
    %1351 = vmatprep.subr.mxu0 0.0
    %1352 = vmatpush1.msra.mxu0 0.0
    %1353 = vmatprep.subr.mxu0 0.0
    %1354 = vmatpush1.msra.mxu0 0.0
    %1355 = vmatprep.subr.mxu0 0.0
    %1356 = vmatpush1.msra.mxu0 0.0
    %1357 = vmatprep.mubr.f32.mxu0 0.0
    %1358 = vmatmul.mubr.f32.gmra.mrb[0].mxu0 %v1291
    %v1359 = vpop.f32.mrb[0].mxu0
    %v1360 = vadd.f32 0.0, %v1359
    %v1361 = vpop.f32.mrb[0].mxu0
    %1362 = vdwg.mxu0
    %v1363 = vadd.f32 %v331, %v1360
    %v1364 = vxor.u32 %v1363, 2147483648
    %v1365 = vmul.f32 %v1364, 1.442695
    %v1366 = vpow.pop %v1365
    %v1367 = vadd.f32 %v1366, 1.0
    %v1368 = vrcp.pop %v1367
    %v1369 = vmul.f32 1.0, %v1368
    %v1370 = vtanh.pop %v1363
    %v1371 = vmul.f32 %v1369, %v1195
    %1373 = vrot.lane.b32.xlu0 %v1370, 64
    %v1374 = vpop.permute.xlu0 %1373
    %v1376 = vmul.f32 %v1369, %v1374
    %1378 = vrot.lane.b32.xlu0 %v1376, 32
    %v1379 = vpop.permute.xlu0 %1378
    %v1381 = vadd.f32 %v1371, %v1379
    %v1382 = vtanh.pop %v1381
    %1384 = vrot.lane.b32.xlu0 %v1382, 64
    %v1385 = vpop.permute.xlu0 %1384
    %v1387 = vmul.f32 %v1369, %v1385
    %vm1388 = vcmp.gt.s32.totalorder %v353, 5
    %v1389 = vsel %vm1388, 1, 0
    %v1390 = vcvt.s32.f32 %v1389
    %v1391 = vmax.f32 %v1387, 0.0
    %1393 = vset.pattern.permute.xlu0 0
    %1394 = vperm.xlu0 %1393, %v1390
    %v1395 = vpop.permute.xlu0 %1394
    %v1397 = vmul.f32 %v1395, %v1391
    %1399 = vrot.lane.b32.xlu0 %v1397, 32
    %v1400 = vpop.permute.xlu0 %1399
    %v1401 = vsel %vm214, %v1400, 0
    %1403 = vmatprep.subr.mxu0 0.0
    %1404 = vmatpush1.msra.mxu0 %v348
    %1405 = vmatprep.subr.mxu0 0.0
    %1406 = vmatpush1.msra.mxu0 %v349
    %1407 = vmatprep.subr.mxu0 0.0
    %1408 = vmatpush1.msra.mxu0 %v350
    %1409 = vmatprep.subr.mxu0 0.0
    %1410 = vmatpush1.msra.mxu0 %v351
    %1411 = vmatprep.subr.mxu0 0.0
    %1412 = vmatpush1.msra.mxu0 0.0
    %1413 = vmatprep.subr.mxu0 0.0
    %1414 = vmatpush1.msra.mxu0 0.0
    %1415 = vmatprep.subr.mxu0 0.0
    %1416 = vmatpush1.msra.mxu0 0.0
    %1417 = vmatprep.subr.mxu0 0.0
    %1418 = vmatpush1.msra.mxu0 0.0
    %1419 = vmatprep.subr.mxu0 0.0
    %1420 = vmatpush1.msra.mxu0 0.0
    %1421 = vmatprep.subr.mxu0 0.0
    %1422 = vmatpush1.msra.mxu0 0.0
    %1423 = vmatprep.subr.mxu0 0.0
    %1424 = vmatpush1.msra.mxu0 0.0
    %1425 = vmatprep.subr.mxu0 0.0
    %1426 = vmatpush1.msra.mxu0 0.0
    %1427 = vmatprep.subr.mxu0 0.0
    %1428 = vmatpush1.msra.mxu0 0.0
    %1429 = vmatprep.subr.mxu0 0.0
    %1430 = vmatpush1.msra.mxu0 0.0
    %1431 = vmatprep.subr.mxu0 0.0
    %1432 = vmatpush1.msra.mxu0 0.0
    %1433 = vmatprep.subr.mxu0 0.0
    %1434 = vmatpush1.msra.mxu0 0.0
    %1435 = vmatprep.subr.mxu0 0.0
    %1436 = vmatpush1.msra.mxu0 0.0
    %1437 = vmatprep.subr.mxu0 0.0
    %1438 = vmatpush1.msra.mxu0 0.0
    %1439 = vmatprep.subr.mxu0 0.0
    %1440 = vmatpush1.msra.mxu0 0.0
    %1441 = vmatprep.subr.mxu0 0.0
    %1442 = vmatpush1.msra.mxu0 0.0
    %1443 = vmatprep.subr.mxu0 0.0
    %1444 = vmatpush1.msra.mxu0 0.0
    %1445 = vmatprep.subr.mxu0 0.0
    %1446 = vmatpush1.msra.mxu0 0.0
    %1447 = vmatprep.subr.mxu0 0.0
    %1448 = vmatpush1.msra.mxu0 0.0
    %1449 = vmatprep.subr.mxu0 0.0
    %1450 = vmatpush1.msra.mxu0 0.0
    %1451 = vmatprep.subr.mxu0 0.0
    %1452 = vmatpush1.msra.mxu0 0.0
    %1453 = vmatprep.subr.mxu0 0.0
    %1454 = vmatpush1.msra.mxu0 0.0
    %1455 = vmatprep.subr.mxu0 0.0
    %1456 = vmatpush1.msra.mxu0 0.0
    %1457 = vmatprep.subr.mxu0 0.0
    %1458 = vmatpush1.msra.mxu0 0.0
    %1459 = vmatprep.subr.mxu0 0.0
    %1460 = vmatpush1.msra.mxu0 0.0
    %1461 = vmatprep.subr.mxu0 0.0
    %1462 = vmatpush1.msra.mxu0 0.0
    %1463 = vmatprep.subr.mxu0 0.0
    %1464 = vmatpush1.msra.mxu0 0.0
    %1465 = vmatprep.subr.mxu0 0.0
    %1466 = vmatpush1.msra.mxu0 0.0
    %1467 = vmatprep.mubr.f32.mxu0 0.0
    %1468 = vmatmul.mubr.f32.gmra.mrb[0].mxu0 %v1401
    %v1469 = vpop.f32.mrb[0].mxu0
    %v1470 = vadd.f32 %v466, %v1469
    %v1471 = vpop.f32.mrb[0].mxu0
    %1472 = vdwg.mxu0
    %1473 = vst [vmem:[#allocation5 + $0x28] sm:$0xff] %v1470
    %1475 = vrot.lane.b32.xlu0 %v1387, 32
    %v1476 = vpop.permute.xlu0 %1475
    %v1477 = vsel %vm214, %v1476, 0
    %1479 = vmatprep.subr.mxu0 0.0
    %1480 = vmatpush1.msra.mxu0 %v344
    %1481 = vmatprep.subr.mxu0 0.0
    %1482 = vmatpush1.msra.mxu0 %v345
    %1483 = vmatprep.subr.mxu0 0.0
    %1484 = vmatpush1.msra.mxu0 %v346
    %1485 = vmatprep.subr.mxu0 0.0
    %1486 = vmatpush1.msra.mxu0 %v347
    %1487 = vmatprep.subr.mxu0 0.0
    %1488 = vmatpush1.msra.mxu0 0.0
    %1489 = vmatprep.subr.mxu0 0.0
    %1490 = vmatpush1.msra.mxu0 0.0
    %1491 = vmatprep.subr.mxu0 0.0
    %1492 = vmatpush1.msra.mxu0 0.0
    %1493 = vmatprep.subr.mxu0 0.0
    %1494 = vmatpush1.msra.mxu0 0.0
    %1495 = vmatprep.subr.mxu0 0.0
    %1496 = vmatpush1.msra.mxu0 0.0
    %1497 = vmatprep.subr.mxu0 0.0
    %1498 = vmatpush1.msra.mxu0 0.0
    %1499 = vmatprep.subr.mxu0 0.0
    %1500 = vmatpush1.msra.mxu0 0.0
    %1501 = vmatprep.subr.mxu0 0.0
    %1502 = vmatpush1.msra.mxu0 0.0
    %1503 = vmatprep.subr.mxu0 0.0
    %1504 = vmatpush1.msra.mxu0 0.0
    %1505 = vmatprep.subr.mxu0 0.0
    %1506 = vmatpush1.msra.mxu0 0.0
    %1507 = vmatprep.subr.mxu0 0.0
    %1508 = vmatpush1.msra.mxu0 0.0
    %1509 = vmatprep.subr.mxu0 0.0
    %1510 = vmatpush1.msra.mxu0 0.0
    %1511 = vmatprep.subr.mxu0 0.0
    %1512 = vmatpush1.msra.mxu0 0.0
    %1513 = vmatprep.subr.mxu0 0.0
    %1514 = vmatpush1.msra.mxu0 0.0
    %1515 = vmatprep.subr.mxu0 0.0
    %1516 = vmatpush1.msra.mxu0 0.0
    %1517 = vmatprep.subr.mxu0 0.0
    %1518 = vmatpush1.msra.mxu0 0.0
    %1519 = vmatprep.subr.mxu0 0.0
    %1520 = vmatpush1.msra.mxu0 0.0
    %1521 = vmatprep.subr.mxu0 0.0
    %1522 = vmatpush1.msra.mxu0 0.0
    %1523 = vmatprep.subr.mxu0 0.0
    %1524 = vmatpush1.msra.mxu0 0.0
    %1525 = vmatprep.subr.mxu0 0.0
    %1526 = vmatpush1.msra.mxu0 0.0
    %1527 = vmatprep.subr.mxu0 0.0
    %1528 = vmatpush1.msra.mxu0 0.0
    %1529 = vmatprep.subr.mxu0 0.0
    %1530 = vmatpush1.msra.mxu0 0.0
    %1531 = vmatprep.subr.mxu0 0.0
    %1532 = vmatpush1.msra.mxu0 0.0
    %1533 = vmatprep.subr.mxu0 0.0
    %1534 = vmatpush1.msra.mxu0 0.0
    %1535 = vmatprep.subr.mxu0 0.0
    %1536 = vmatpush1.msra.mxu0 0.0
    %1537 = vmatprep.subr.mxu0 0.0
    %1538 = vmatpush1.msra.mxu0 0.0
    %1539 = vmatprep.subr.mxu0 0.0
    %1540 = vmatpush1.msra.mxu0 0.0
    %1541 = vmatprep.subr.mxu0 0.0
    %1542 = vmatpush1.msra.mxu0 0.0
    %1543 = vmatprep.mubr.f32.mxu0 0.0
    %1544 = vmatmul.mubr.f32.gmra.mrb[0].mxu0 %v1477
    %v1545 = vpop.f32.mrb[0].mxu0
    %v1546 = vadd.f32 0.0, %v1545
    %v1547 = vpop.f32.mrb[0].mxu0
    %1548 = vdwg.mxu0
    %v1549 = vadd.f32 %v336, %v1546
    %v1550 = vxor.u32 %v1549, 2147483648
    %v1551 = vmul.f32 %v1550, 1.442695
    %v1552 = vpow.pop %v1551
    %v1553 = vadd.f32 %v1552, 1.0
    %v1554 = vrcp.pop %v1553
    %v1555 = vmul.f32 1.0, %v1554
    %v1556 = vtanh.pop %v1549
    %v1557 = vmul.f32 %v1555, %v1381
    %1559 = vrot.lane.b32.xlu0 %v1556, 64
    %v1560 = vpop.permute.xlu0 %1559
    %v1562 = vmul.f32 %v1555, %v1560
    %1564 = vrot.lane.b32.xlu0 %v1562, 32
    %v1565 = vpop.permute.xlu0 %1564
    %v1567 = vadd.f32 %v1557, %v1565
    %v1568 = vtanh.pop %v1567
    %1570 = vrot.lane.b32.xlu0 %v1568, 64
    %v1571 = vpop.permute.xlu0 %1570
    %v1573 = vmul.f32 %v1555, %v1571
    %vm1574 = vcmp.gt.s32.totalorder %v353, 6
    %v1575 = vsel %vm1574, 1, 0
    %v1576 = vcvt.s32.f32 %v1575
    %v1577 = vmax.f32 %v1573, 0.0
    %1579 = vset.pattern.permute.xlu0 0
    %1580 = vperm.xlu0 %1579, %v1576
    %v1581 = vpop.permute.xlu0 %1580
    %v1583 = vmul.f32 %v1581, %v1577
    %1585 = vrot.lane.b32.xlu0 %v1583, 32
    %v1586 = vpop.permute.xlu0 %1585
    %v1587 = vsel %vm214, %v1586, 0
    %1589 = vmatprep.subr.mxu0 0.0
    %1590 = vmatpush1.msra.mxu0 %v348
    %1591 = vmatprep.subr.mxu0 0.0
    %1592 = vmatpush1.msra.mxu0 %v349
    %1593 = vmatprep.subr.mxu0 0.0
    %1594 = vmatpush1.msra.mxu0 %v350
    %1595 = vmatprep.subr.mxu0 0.0
    %1596 = vmatpush1.msra.mxu0 %v351
    %1597 = vmatprep.subr.mxu0 0.0
    %1598 = vmatpush1.msra.mxu0 0.0
    %1599 = vmatprep.subr.mxu0 0.0
    %1600 = vmatpush1.msra.mxu0 0.0
    %1601 = vmatprep.subr.mxu0 0.0
    %1602 = vmatpush1.msra.mxu0 0.0
    %1603 = vmatprep.subr.mxu0 0.0
    %1604 = vmatpush1.msra.mxu0 0.0
    %1605 = vmatprep.subr.mxu0 0.0
    %1606 = vmatpush1.msra.mxu0 0.0
    %1607 = vmatprep.subr.mxu0 0.0
    %1608 = vmatpush1.msra.mxu0 0.0
    %1609 = vmatprep.subr.mxu0 0.0
    %1610 = vmatpush1.msra.mxu0 0.0
    %1611 = vmatprep.subr.mxu0 0.0
    %1612 = vmatpush1.msra.mxu0 0.0
    %1613 = vmatprep.subr.mxu0 0.0
    %1614 = vmatpush1.msra.mxu0 0.0
    %1615 = vmatprep.subr.mxu0 0.0
    %1616 = vmatpush1.msra.mxu0 0.0
    %1617 = vmatprep.subr.mxu0 0.0
    %1618 = vmatpush1.msra.mxu0 0.0
    %1619 = vmatprep.subr.mxu0 0.0
    %1620 = vmatpush1.msra.mxu0 0.0
    %1621 = vmatprep.subr.mxu0 0.0
    %1622 = vmatpush1.msra.mxu0 0.0
    %1623 = vmatprep.subr.mxu0 0.0
    %1624 = vmatpush1.msra.mxu0 0.0
    %1625 = vmatprep.subr.mxu0 0.0
    %1626 = vmatpush1.msra.mxu0 0.0
    %1627 = vmatprep.subr.mxu0 0.0
    %1628 = vmatpush1.msra.mxu0 0.0
    %1629 = vmatprep.subr.mxu0 0.0
    %1630 = vmatpush1.msra.mxu0 0.0
    %1631 = vmatprep.subr.mxu0 0.0
    %1632 = vmatpush1.msra.mxu0 0.0
    %1633 = vmatprep.subr.mxu0 0.0
    %1634 = vmatpush1.msra.mxu0 0.0
    %1635 = vmatprep.subr.mxu0 0.0
    %1636 = vmatpush1.msra.mxu0 0.0
    %1637 = vmatprep.subr.mxu0 0.0
    %1638 = vmatpush1.msra.mxu0 0.0
    %1639 = vmatprep.subr.mxu0 0.0
    %1640 = vmatpush1.msra.mxu0 0.0
    %1641 = vmatprep.subr.mxu0 0.0
    %1642 = vmatpush1.msra.mxu0 0.0
    %1643 = vmatprep.subr.mxu0 0.0
    %1644 = vmatpush1.msra.mxu0 0.0
    %1645 = vmatprep.subr.mxu0 0.0
    %1646 = vmatpush1.msra.mxu0 0.0
    %1647 = vmatprep.subr.mxu0 0.0
    %1648 = vmatpush1.msra.mxu0 0.0
    %1649 = vmatprep.subr.mxu0 0.0
    %1650 = vmatpush1.msra.mxu0 0.0
    %1651 = vmatprep.subr.mxu0 0.0
    %1652 = vmatpush1.msra.mxu0 0.0
    %1653 = vmatprep.mubr.f32.mxu0 0.0
    %1654 = vmatmul.mubr.f32.gmra.mrb[0].mxu0 %v1587
    %v1655 = vpop.f32.mrb[0].mxu0
    %v1656 = vadd.f32 %v466, %v1655
    %v1657 = vpop.f32.mrb[0].mxu0
    %1658 = vdwg.mxu0
    %1659 = vst [vmem:[#allocation5 + $0x30] sm:$0xff] %v1656
    %1661 = vrot.lane.b32.xlu0 %v1573, 32
    %v1662 = vpop.permute.xlu0 %1661
    %v1663 = vsel %vm214, %v1662, 0
    %1665 = vmatprep.subr.mxu0 0.0
    %1666 = vmatpush1.msra.mxu0 %v344
    %1667 = vmatprep.subr.mxu0 0.0
    %1668 = vmatpush1.msra.mxu0 %v345
    %1669 = vmatprep.subr.mxu0 0.0
    %1670 = vmatpush1.msra.mxu0 %v346
    %1671 = vmatprep.subr.mxu0 0.0
    %1672 = vmatpush1.msra.mxu0 %v347
    %1673 = vmatprep.subr.mxu0 0.0
    %1674 = vmatpush1.msra.mxu0 0.0
    %1675 = vmatprep.subr.mxu0 0.0
    %1676 = vmatpush1.msra.mxu0 0.0
    %1677 = vmatprep.subr.mxu0 0.0
    %1678 = vmatpush1.msra.mxu0 0.0
    %1679 = vmatprep.subr.mxu0 0.0
    %1680 = vmatpush1.msra.mxu0 0.0
    %1681 = vmatprep.subr.mxu0 0.0
    %1682 = vmatpush1.msra.mxu0 0.0
    %1683 = vmatprep.subr.mxu0 0.0
    %1684 = vmatpush1.msra.mxu0 0.0
    %1685 = vmatprep.subr.mxu0 0.0
    %1686 = vmatpush1.msra.mxu0 0.0
    %1687 = vmatprep.subr.mxu0 0.0
    %1688 = vmatpush1.msra.mxu0 0.0
    %1689 = vmatprep.subr.mxu0 0.0
    %1690 = vmatpush1.msra.mxu0 0.0
    %1691 = vmatprep.subr.mxu0 0.0
    %1692 = vmatpush1.msra.mxu0 0.0
    %1693 = vmatprep.subr.mxu0 0.0
    %1694 = vmatpush1.msra.mxu0 0.0
    %1695 = vmatprep.subr.mxu0 0.0
    %1696 = vmatpush1.msra.mxu0 0.0
    %1697 = vmatprep.subr.mxu0 0.0
    %1698 = vmatpush1.msra.mxu0 0.0
    %1699 = vmatprep.subr.mxu0 0.0
    %1700 = vmatpush1.msra.mxu0 0.0
    %1701 = vmatprep.subr.mxu0 0.0
    %1702 = vmatpush1.msra.mxu0 0.0
    %1703 = vmatprep.subr.mxu0 0.0
    %1704 = vmatpush1.msra.mxu0 0.0
    %1705 = vmatprep.subr.mxu0 0.0
    %1706 = vmatpush1.msra.mxu0 0.0
    %1707 = vmatprep.subr.mxu0 0.0
    %1708 = vmatpush1.msra.mxu0 0.0
    %1709 = vmatprep.subr.mxu0 0.0
    %1710 = vmatpush1.msra.mxu0 0.0
    %1711 = vmatprep.subr.mxu0 0.0
    %1712 = vmatpush1.msra.mxu0 0.0
    %1713 = vmatprep.subr.mxu0 0.0
    %1714 = vmatpush1.msra.mxu0 0.0
    %1715 = vmatprep.subr.mxu0 0.0
    %1716 = vmatpush1.msra.mxu0 0.0
    %1717 = vmatprep.subr.mxu0 0.0
    %1718 = vmatpush1.msra.mxu0 0.0
    %1719 = vmatprep.subr.mxu0 0.0
    %1720 = vmatpush1.msra.mxu0 0.0
    %1721 = vmatprep.subr.mxu0 0.0
    %1722 = vmatpush1.msra.mxu0 0.0
    %1723 = vmatprep.subr.mxu0 0.0
    %1724 = vmatpush1.msra.mxu0 0.0
    %1725 = vmatprep.subr.mxu0 0.0
    %1726 = vmatpush1.msra.mxu0 0.0
    %1727 = vmatprep.subr.mxu0 0.0
    %1728 = vmatpush1.msra.mxu0 0.0
    %1729 = vmatprep.mubr.f32.mxu0 0.0
    %1730 = vmatmul.mubr.f32.gmra.mrb[0].mxu0 %v1663
    %v1731 = vpop.f32.mrb[0].mxu0
    %v1732 = vadd.f32 0.0, %v1731
    %v1733 = vpop.f32.mrb[0].mxu0
    %1734 = vdwg.mxu0
    %v1735 = vadd.f32 %v341, %v1732
    %v1736 = vxor.u32 %v1735, 2147483648
    %v1737 = vmul.f32 %v1736, 1.442695
    %v1738 = vpow.pop %v1737
    %v1739 = vadd.f32 %v1738, 1.0
    %v1740 = vrcp.pop %v1739
    %v1741 = vmul.f32 1.0, %v1740
    %v1742 = vtanh.pop %v1735
    %v1743 = vmul.f32 %v1741, %v1567
    %1745 = vrot.lane.b32.xlu0 %v1742, 64
    %v1746 = vpop.permute.xlu0 %1745
    %v1748 = vmul.f32 %v1741, %v1746
    %1750 = vrot.lane.b32.xlu0 %v1748, 32
    %v1751 = vpop.permute.xlu0 %1750
    %v1753 = vadd.f32 %v1743, %v1751
    %v1754 = vtanh.pop %v1753
    %1756 = vrot.lane.b32.xlu0 %v1754, 64
    %v1757 = vpop.permute.xlu0 %1756
    %v1759 = vmul.f32 %v1741, %v1757
    %vm1760 = vcmp.gt.s32.totalorder %v353, 7
    %v1761 = vsel %vm1760, 1, 0
    %v1762 = vcvt.s32.f32 %v1761
    %v1763 = vmax.f32 %v1759, 0.0
    %1765 = vset.pattern.permute.xlu0 0
    %1766 = vperm.xlu0 %1765, %v1762
    %v1767 = vpop.permute.xlu0 %1766
    %v1769 = vmul.f32 %v1767, %v1763
    %1771 = vrot.lane.b32.xlu0 %v1769, 32
    %v1772 = vpop.permute.xlu0 %1771
    %v1773 = vsel %vm214, %v1772, 0
    %1775 = vmatprep.subr.mxu0 0.0
    %1776 = vmatpush1.msra.mxu0 %v348
    %1777 = vmatprep.subr.mxu0 0.0
    %1778 = vmatpush1.msra.mxu0 %v349
    %1779 = vmatprep.subr.mxu0 0.0
    %1780 = vmatpush1.msra.mxu0 %v350
    %1781 = vmatprep.subr.mxu0 0.0
    %1782 = vmatpush1.msra.mxu0 %v351
    %1783 = vmatprep.subr.mxu0 0.0
    %1784 = vmatpush1.msra.mxu0 0.0
    %1785 = vmatprep.subr.mxu0 0.0
    %1786 = vmatpush1.msra.mxu0 0.0
    %1787 = vmatprep.subr.mxu0 0.0
    %1788 = vmatpush1.msra.mxu0 0.0
    %1789 = vmatprep.subr.mxu0 0.0
    %1790 = vmatpush1.msra.mxu0 0.0
    %1791 = vmatprep.subr.mxu0 0.0
    %1792 = vmatpush1.msra.mxu0 0.0
    %1793 = vmatprep.subr.mxu0 0.0
    %1794 = vmatpush1.msra.mxu0 0.0
    %1795 = vmatprep.subr.mxu0 0.0
    %1796 = vmatpush1.msra.mxu0 0.0
    %1797 = vmatprep.subr.mxu0 0.0
    %1798 = vmatpush1.msra.mxu0 0.0
    %1799 = vmatprep.subr.mxu0 0.0
    %1800 = vmatpush1.msra.mxu0 0.0
    %1801 = vmatprep.subr.mxu0 0.0
    %1802 = vmatpush1.msra.mxu0 0.0
    %1803 = vmatprep.subr.mxu0 0.0
    %1804 = vmatpush1.msra.mxu0 0.0
    %1805 = vmatprep.subr.mxu0 0.0
    %1806 = vmatpush1.msra.mxu0 0.0
    %1807 = vmatprep.subr.mxu0 0.0
    %1808 = vmatpush1.msra.mxu0 0.0
    %1809 = vmatprep.subr.mxu0 0.0
    %1810 = vmatpush1.msra.mxu0 0.0
    %1811 = vmatprep.subr.mxu0 0.0
    %1812 = vmatpush1.msra.mxu0 0.0
    %1813 = vmatprep.subr.mxu0 0.0
    %1814 = vmatpush1.msra.mxu0 0.0
    %1815 = vmatprep.subr.mxu0 0.0
    %1816 = vmatpush1.msra.mxu0 0.0
    %1817 = vmatprep.subr.mxu0 0.0
    %1818 = vmatpush1.msra.mxu0 0.0
    %1819 = vmatprep.subr.mxu0 0.0
    %1820 = vmatpush1.msra.mxu0 0.0
    %1821 = vmatprep.subr.mxu0 0.0
    %1822 = vmatpush1.msra.mxu0 0.0
    %1823 = vmatprep.subr.mxu0 0.0
    %1824 = vmatpush1.msra.mxu0 0.0
    %1825 = vmatprep.subr.mxu0 0.0
    %1826 = vmatpush1.msra.mxu0 0.0
    %1827 = vmatprep.subr.mxu0 0.0
    %1828 = vmatpush1.msra.mxu0 0.0
    %1829 = vmatprep.subr.mxu0 0.0
    %1830 = vmatpush1.msra.mxu0 0.0
    %1831 = vmatprep.subr.mxu0 0.0
    %1832 = vmatpush1.msra.mxu0 0.0
    %1833 = vmatprep.subr.mxu0 0.0
    %1834 = vmatpush1.msra.mxu0 0.0
    %1835 = vmatprep.subr.mxu0 0.0
    %1836 = vmatpush1.msra.mxu0 0.0
    %1837 = vmatprep.subr.mxu0 0.0
    %1838 = vmatpush1.msra.mxu0 0.0
    %1839 = vmatprep.mubr.f32.mxu0 0.0
    %1840 = vmatmul.mubr.f32.gmra.mrb[0].mxu0 %v1773
    %v1841 = vpop.f32.mrb[0].mxu0
    %v1842 = vadd.f32 %v466, %v1841
    %v1843 = vpop.f32.mrb[0].mxu0
    %1844 = vdwg.mxu0
    %1845 = vst [vmem:[#allocation5 + $0x38] sm:$0xff] %v1842
    // Predicated region
    $region42: #{tpu_custom_call.1} parent=1 // pred_check
      _
    $region43: #{tpu_custom_call.1} parent=1 // pred_check_branch
      %1847 = sbr.rel (0) target = $region45
    $region44: #{tpu_custom_call.1} parent=1 // pred_region
      %s1849 = ssub.s32 1024, 1024
      %1850 = vsyncadd [#allocation4], %s1849
      %s1851 = sshll.u32 [#allocation5], 4
      %s1852 = int_to_ptr.vmem [resolvable:$true] %s1851
      %1857 = dma.vmem_to_hbm [thread:$0]  %s1852, 1024, %s9, [#allocation4], 128, 128, 8
    $region45: #{tpu_custom_call.1} parent=1 // pred_fallthru
      _
    // Predicated region
    $region46: #{tpu_custom_call.1} parent=1 // pred_check
      _
    $region47: #{tpu_custom_call.1} parent=1 // pred_check_branch
      %1859 = sbr.rel (0) target = $region49
    $region48: #{tpu_custom_call.1} parent=1 // pred_region
      %1860 = dma.done [#allocation4], 1024
    $region49: #{tpu_custom_call.1} parent=1 // pred_fallthru
      _
    %1861 = vsyncpa [#allocation3], 1
    %1862 = vsyncpa [#allocation4], 1

</llo_original>
